<compile_context>
chip_gen: v5e
topology: v5e:2x2
jax: 0.10.0
libtpu: 0.0.40
codegen_flags: <defaults>
</compile_context>

<pallas_src>
import functools

import jax
import jax.numpy as jnp
from jax import lax
from jax.experimental import pallas as pl
from jax.experimental.pallas import tpu as pltpu

EPS = 1e-5  # torch.nn.InstanceNorm2d default eps


def _round_up(x, m):
    return (x + m - 1) // m * m


# ---------------------------------------------------------------------------
# In-kernel helpers
# ---------------------------------------------------------------------------
def _inorm_relu(y):
    # InstanceNorm2d(affine=False) over the flattened spatial (lane) axis + ReLU.
    # Single-pass stats: the two lane reductions are independent.
    mean = jnp.mean(y, axis=-1, keepdims=True)
    meansq = jnp.mean(y * y, axis=-1, keepdims=True)
    var = jnp.maximum(meansq - mean * mean, 0.0)
    return jnp.maximum((y - mean) * lax.rsqrt(var + EPS), 0.0)


def _conv3tap(inp, w_packed, m_lo, m_hi, shift):
    """3-tap Conv_block on a (MP, HW) tile: single dot with contraction 3*MP.

    w_packed is (MP, 3*MP) with columns [tap@-shift | tap@0 | tap@+shift];
    zero padding at the spatial boundary is handled by masks m_lo / m_hi.
    """
    hw = inp.shape[-1]
    xm = jnp.where(m_lo, 0.0, pltpu.roll(inp, shift=shift, axis=1))       # x[.. - shift]
    xp = jnp.where(m_hi, 0.0, pltpu.roll(inp, shift=hw - shift, axis=1))  # x[.. + shift]
    stacked = jnp.concatenate([xm, inp, xp], axis=0)                      # (3*MP, HW)
    z = jnp.dot(w_packed, stacked, preferred_element_type=jnp.float32)
    return _inorm_relu(z)


# ---------------------------------------------------------------------------
# Fused kernel: whole Double_conv forward for one batch element
# ---------------------------------------------------------------------------
def _double_conv_kernel(x_ref, wmid_ref, wb1_ref, fcw_ref, fcsw_ref, w1_ref,
                        wb2_ref, w2_ref, *rest, MP, H, W, use_short_conv):
    if use_short_conv:
        wshort_ref, o_ref = rest
    else:
        (o_ref,) = rest

    HW = H * W
    x = x_ref[0]                                                   # (in_ch, HW)

    # ---- short connection (identity, or 1x1 conv; its bias is folded into w2) ----
    if use_short_conv:
        short = jnp.dot(wshort_ref[...], x, preferred_element_type=jnp.float32)
    else:
        short = x                                                  # in_ch == out_ch

    # ---- conv1x1_mid + InstanceNorm + ReLU (bias cancels in the norm) ----
    y = _inorm_relu(jnp.dot(wmid_ref[...], x, preferred_element_type=jnp.float32))
    # y: (6*MP, HW), each MP-row tile is one branch (rows >= mid are zero).

    # ---- constants: boundary masks + "ones" rows for folded biases ----
    hw_idx = lax.broadcasted_iota(jnp.int32, (MP, HW), 1)
    m_w_lo = (hw_idx % W) == 0            # w == 0     -> no left neighbour
    m_w_hi = (hw_idx % W) == (W - 1)      # w == W - 1 -> no right neighbour
    m_h_lo = hw_idx < W                   # h == 0     -> no upper neighbour
    m_h_hi = hw_idx >= (HW - W)           # h == H - 1 -> no lower neighbour
    row8 = lax.broadcasted_iota(jnp.int32, (8, HW), 0)
    ones_row = jnp.where(row8 == 0, 1.0, 0.0).astype(jnp.float32)  # (8, HW)
    ones_col = jnp.where(
        lax.broadcasted_iota(jnp.int32, (8, 1), 0) == 0, 1.0, 0.0
    ).astype(jnp.float32)                                          # (8, 1)

    # ---- chain 1: five [1,3] Conv_blocks with inter-branch residuals ----
    branches = [y[0:MP]]                  # x0
    prev = branches[0]
    for j in range(5):                    # x1..x5 : conv(slice_{j+1} + previous)
        inp = y[(j + 1) * MP:(j + 2) * MP] + prev
        prev = _conv3tap(inp, wb1_ref[j], m_w_lo, m_w_hi, 1)
        branches.append(prev)

    # ---- SK attention: avg-pool + MLP + softmax, entirely in VMEM ----
    acc = (branches[0] + branches[1] + branches[2]
           + branches[3] + branches[4] + branches[5])
    pooled = jnp.mean(acc, axis=1, keepdims=True)                  # (MP, 1)
    sk2 = jnp.dot(fcw_ref[...],
                  jnp.concatenate([pooled, ones_col], axis=0),     # fc bias folded
                  preferred_element_type=jnp.float32)              # (NUMP, 1)
    logits = jnp.dot(fcsw_ref[...],
                     jnp.concatenate([sk2, ones_col], axis=0),     # fcs biases folded
                     preferred_element_type=jnp.float32)           # (6*MP, 1)
    lg = [logits[i * MP:(i + 1) * MP] for i in range(6)]
    mx = jnp.maximum(jnp.maximum(jnp.maximum(lg[0], lg[1]),
                                 jnp.maximum(lg[2], lg[3])),
                     jnp.maximum(lg[4], lg[5]))
    ex = [jnp.exp(v - mx) for v in lg]
    inv_denom = 1.0 / (ex[0] + ex[1] + ex[2] + ex[3] + ex[4] + ex[5])
    atts = [e * inv_denom for e in ex]                             # softmax over branches

    # ---- attention scaling + conv1x1_1 as ONE deep-contraction dot ----
    scaled = [branches[i] * atts[i] for i in range(6)]
    stacked1 = jnp.concatenate(scaled + [ones_row], axis=0)        # (6*MP+8, HW)
    y2 = jnp.dot(w1_ref[...], stacked1,
                 preferred_element_type=jnp.float32)               # bias folded

    # ---- chain 2: five [3,1] Conv_blocks (first one has NO residual) ----
    outs = [y2[0:MP]]                     # x0 passes through unchanged
    prev = None
    for j in range(5):
        sl = y2[(j + 1) * MP:(j + 2) * MP]
        inp = sl if j == 0 else prev + sl
        prev = _conv3tap(inp, wb2_ref[j], m_h_lo, m_h_hi, W)
        outs.append(prev)

    # ---- conv1x1_2 (bias + short-conv bias folded) + residual + ReLU ----
    stacked2 = jnp.concatenate(outs + [ones_row], axis=0)          # (6*MP+8, HW)
    out = jnp.dot(w2_ref[...], stacked2,
                  preferred_element_type=jnp.float32) + short
    o_ref[0] = jnp.maximum(out, 0.0)


# ---------------------------------------------------------------------------
# Wrapper
# ---------------------------------------------------------------------------
def double_conv_forward(x_nchw, packed, *, H, W, MP, use_short_conv):
    B, in_ch = x_nchw.shape[0], x_nchw.shape[1]
    HW = H * W
    out_ch = packed["w2_p"].shape[0]
    if not use_short_conv and in_ch != out_ch:
        raise ValueError("identity residual requires in_ch == out_ch")
    x = x_nchw.reshape(B, in_ch, HW).astype(jnp.float32)

    kern = functools.partial(_double_conv_kernel, MP=MP, H=H, W=W,
                             use_short_conv=use_short_conv)
    args = [x, packed["wmid_p"], packed["wb1_p"], packed["fcw_p"],
            packed["fcsw_p"], packed["w1_p"], packed["wb2_p"], packed["w2_p"]]
    in_specs = [
        pl.BlockSpec((1, in_ch, HW), lambda b: (b, 0, 0)),
        pl.BlockSpec(packed["wmid_p"].shape, lambda b: (0, 0)),
        pl.BlockSpec(packed["wb1_p"].shape, lambda b: (0, 0, 0)),
        pl.BlockSpec(packed["fcw_p"].shape, lambda b: (0, 0)),
        pl.BlockSpec(packed["fcsw_p"].shape, lambda b: (0, 0)),
        pl.BlockSpec(packed["w1_p"].shape, lambda b: (0, 0)),
        pl.BlockSpec(packed["wb2_p"].shape, lambda b: (0, 0, 0)),
        pl.BlockSpec(packed["w2_p"].shape, lambda b: (0, 0)),
    ]
    if use_short_conv:
        args.append(packed["wshort_p"])
        in_specs.append(pl.BlockSpec(packed["wshort_p"].shape, lambda b: (0, 0)))

    out = pl.pallas_call(
        kern,
        out_shape=jax.ShapeDtypeStruct((B, out_ch, HW), jnp.float32),
        grid=(B,),
        in_specs=in_specs,
        out_specs=pl.BlockSpec((1, out_ch, HW), lambda b: (b, 0, 0)),
        compiler_params=pltpu.CompilerParams(
            dimension_semantics=("parallel",),        # 2 TCs on v7x split the batch
            vmem_limit_bytes=32 * 1024 * 1024),
    )(*args)
    return out.reshape(B, out_ch, H, W)


# ---------------------------------------------------------------------------
# Parameters: torch-like shapes + packing into the padded kernel layout
# ---------------------------------------------------------------------------
def init_params(key, in_ch, out_ch):
    """Deterministic synthetic params, shapes mirroring Double_conv.__init__.

    NOTE: biases of convs that feed InstanceNorm2d(affine=False) are omitted
    on purpose — the mean subtraction cancels them exactly.
    """
    mid = out_ch // 6
    num = max(mid // 2, 12)
    keys = iter(jax.random.split(key, 24))

    def rnd(shape, scale=0.1):
        return (scale * jax.random.normal(next(keys), shape)).astype(jnp.float32)

    p = {
        # Conv_block(in_ch, out_ch, [1,1]).conv.weight[:, :, 0, 0]
        "w_mid": rnd((out_ch, in_ch)),
        # 5 x Conv_block(mid, mid, [1,3]); wb1[j, co, ci, t] = W_j[co, ci, 0, t]
        "wb1": rnd((5, mid, mid, 3)),
        # conv1x1_1 (plain Conv2d, keeps its bias)
        "w_1x1_1": rnd((out_ch, out_ch)), "b_1x1_1": rnd((out_ch,)),
        # 5 x Conv_block(mid, mid, [3,1]); wb2[j, co, ci, t] = W_j[co, ci, t, 0]
        "wb2": rnd((5, mid, mid, 3)),
        # conv1x1_2 (plain Conv2d, keeps its bias)
        "w_1x1_2": rnd((out_ch, out_ch)), "b_1x1_2": rnd((out_ch,)),
        # SK attention: fc Linear(mid -> num), fcs[i] Linear(num -> mid)
        "fc_w": rnd((num, mid)), "fc_b": rnd((num,)),
        "fcs_w": rnd((6, mid, num)), "fcs_b": rnd((6, mid)),
    }
    if in_ch > out_ch:
        p["w_short"] = rnd((out_ch, in_ch))
        p["b_short"] = rnd((out_ch,))
    return p


def pack_params(p, in_ch, out_ch):
    """Pack torch-like params into the sublane-padded (MP = round_up(mid,8))
    layout used by the fused kernel; all biases are folded into the weights."""
    mid = out_ch // 6
    num = p["fc_w"].shape[0]
    MP = max(8, _round_up(mid, 8))
    NUMP = max(8, _round_up(num, 8))
    f32 = jnp.float32

    wmid_p = jnp.zeros((6 * MP, in_ch), f32)
    for b in range(6):
        wmid_p = wmid_p.at[b * MP:b * MP + mid].set(p["w_mid"][b * mid:(b + 1) * mid])

    def pack_taps(wb):
        out = jnp.zeros((5, MP, 3 * MP), f32)
        for t in range(3):
            out = out.at[:, :mid, t * MP:t * MP + mid].set(wb[..., t])
        return out

    wb1_p = pack_taps(p["wb1"])
    wb2_p = pack_taps(p["wb2"])

    fcw_p = jnp.zeros((NUMP, MP + 8), f32)
    fcw_p = fcw_p.at[:num, :mid].set(p["fc_w"])
    fcw_p = fcw_p.at[:num, MP].set(p["fc_b"])          # bias column (ones row in-kernel)

    fcsw_p = jnp.zeros((6 * MP, NUMP + 8), f32)
    for b in range(6):
        fcsw_p = fcsw_p.at[b * MP:b * MP + mid, :num].set(p["fcs_w"][b])
        fcsw_p = fcsw_p.at[b * MP:b * MP + mid, NUMP].set(p["fcs_b"][b])

    w1_p = jnp.zeros((6 * MP, 6 * MP + 8), f32)
    for bo in range(6):
        for bi in range(6):
            w1_p = w1_p.at[bo * MP:bo * MP + mid, bi * MP:bi * MP + mid].set(
                p["w_1x1_1"][bo * mid:(bo + 1) * mid, bi * mid:(bi + 1) * mid])
        w1_p = w1_p.at[bo * MP:bo * MP + mid, 6 * MP].set(
            p["b_1x1_1"][bo * mid:(bo + 1) * mid])

    w2_p = jnp.zeros((out_ch, 6 * MP + 8), f32)
    for bi in range(6):
        w2_p = w2_p.at[:, bi * MP:bi * MP + mid].set(
            p["w_1x1_2"][:, bi * mid:(bi + 1) * mid])
    b2 = p["b_1x1_2"]
    if "b_short" in p:
        b2 = b2 + p["b_short"]          # short-conv bias folds into the final bias
    w2_p = w2_p.at[:, 6 * MP].set(b2)

    packed = {"wmid_p": wmid_p, "wb1_p": wb1_p, "wb2_p": wb2_p,
              "fcw_p": fcw_p, "fcsw_p": fcsw_p, "w1_p": w1_p, "w2_p": w2_p}
    if "w_short" in p:
        packed["wshort_p"] = p["w_short"].astype(f32)
    return packed, MP


# ---------------------------------------------------------------------------
# Pure-JAX reference (mirrors the PyTorch module) for a correctness check
# ---------------------------------------------------------------------------
def reference_forward(x, p, *, in_ch, out_ch):
    mid = out_ch // 6
    _, _, H, W = x.shape
    x = x.astype(jnp.float32)

    def conv1x1(v, w, b=None):
        y = jnp.einsum("oc,bchw->bohw", w, v)
        return y if b is None else y + b[None, :, None, None]

    def inorm_relu(y):
        mean = y.mean(axis=(2, 3), keepdims=True)
        var = ((y - mean) ** 2).mean(axis=(2, 3), keepdims=True)
        return jnp.maximum((y - mean) / jnp.sqrt(var + EPS), 0.0)

    def conv_block_w(v, w):   # [1,3] kernel, padding (0,1)
        vp = jnp.pad(v, ((0, 0), (0, 0), (0, 0), (1, 1)))
        y = sum(jnp.einsum("oc,bchw->bohw", w[..., t], vp[:, :, :, t:t + W])
                for t in range(3))
        return inorm_relu(y)

    def conv_block_h(v, w):   # [3,1] kernel, padding (1,0)
        vp = jnp.pad(v, ((0, 0), (0, 0), (1, 1), (0, 0)))
        y = sum(jnp.einsum("oc,bchw->bohw", w[..., t], vp[:, :, t:t + H, :])
                for t in range(3))
        return inorm_relu(y)

    short = conv1x1(x, p["w_short"], p["b_short"]) if in_ch > out_ch else x
    y = inorm_relu(conv1x1(x, p["w_mid"]))
    xs = [y[:, i * mid:(i + 1) * mid] for i in range(6)]
    outs1 = [xs[0]]
    prev = xs[0]
    for j in range(5):
        prev = conv_block_w(xs[j + 1] + prev, p["wb1"][j])
        outs1.append(prev)
    xx = sum(outs1)
    sk1 = xx.mean(axis=(2, 3))
    sk2 = sk1 @ p["fc_w"].T + p["fc_b"]
    att = jnp.stack([sk2 @ p["fcs_w"][i].T + p["fcs_b"][i] for i in range(6)], axis=1)
    att = jax.nn.softmax(att, axis=1)
    scaled = [outs1[i] * att[:, i][:, :, None, None] for i in range(6)]
    y2 = conv1x1(jnp.concatenate(scaled, axis=1), p["w_1x1_1"], p["b_1x1_1"])
    xs2 = [y2[:, i * mid:(i + 1) * mid] for i in range(6)]
    outs2 = [xs2[0]]
    prev = None
    for j in range(5):
        inp = xs2[j + 1] if j == 0 else prev + xs2[j + 1]
        prev = conv_block_h(inp, p["wb2"][j])
        outs2.append(prev)
    out = conv1x1(jnp.concatenate(outs2, axis=1), p["w_1x1_2"], p["b_1x1_2"]) + short
    return jnp.maximum(out, 0.0)


# ---------------------------------------------------------------------------
if __name__ == "__main__":
    in_ch, out_ch = 12, 12        # in_ch == out_ch so the identity residual is valid
    B, H, W = 2, 16, 16

    key = jax.random.PRNGKey(0)
    kx, kp = jax.random.split(key)
    x = jax.random.normal(kx, (B, in_ch, H, W), dtype=jnp.float32)
    params = init_params(kp, in_ch, out_ch)
    packed, MP = pack_params(params, in_ch, out_ch)
    use_short_conv = in_ch > out_ch

    fwd = jax.jit(functools.partial(double_conv_forward, H=H, W=W, MP=MP,
                                    use_short_conv=use_short_conv))
    out = fwd(x, packed)
    jax.block_until_ready(out)
    assert out.shape == (B, out_ch, H, W), out.shape
    assert bool(jnp.all(jnp.isfinite(out)))

    ref = reference_forward(x, params, in_ch=in_ch, out_ch=out_ch)
    max_err = float(jnp.max(jnp.abs(out - ref)))
    assert max_err < 2e-3, f"max abs error vs reference: {max_err}"
    print("KERNEL_OK")
</pallas_src>

<mosaic_0001>
module attributes {stable_mosaic.version = 11 : i64} {
  func.func @_double_conv_kernel(%arg0: i32, %arg1: memref<1x12x256xf32, #tpu.memory_space<vmem>>, %arg2: memref<48x12xf32, #tpu.memory_space<vmem>>, %arg3: memref<5x8x24xf32, #tpu.memory_space<vmem>>, %arg4: memref<16x16xf32, #tpu.memory_space<vmem>>, %arg5: memref<48x24xf32, #tpu.memory_space<vmem>>, %arg6: memref<48x56xf32, #tpu.memory_space<vmem>>, %arg7: memref<5x8x24xf32, #tpu.memory_space<vmem>>, %arg8: memref<12x56xf32, #tpu.memory_space<vmem>>, %arg9: memref<1x12x256xf32, #tpu.memory_space<vmem>>) attributes {dimension_semantics = [#tpu.dimension_semantics<parallel>], iteration_bounds = array<i64: 2>, scalar_prefetch = 0 : i64, scratch_operands = 0 : i64, tpu.core_type = #tpu.core_type<tc>, window_params = [{transform_indices = @transform_0, window_bounds = array<i64: 1, 12, 256>}, {pipeline_mode = #tpu.pipeline_mode<synchronous>, transform_indices = @transform_1, window_bounds = array<i64: 48, 12>}, {pipeline_mode = #tpu.pipeline_mode<synchronous>, transform_indices = @transform_2, window_bounds = array<i64: 5, 8, 24>}, {pipeline_mode = #tpu.pipeline_mode<synchronous>, transform_indices = @transform_3, window_bounds = array<i64: 16, 16>}, {pipeline_mode = #tpu.pipeline_mode<synchronous>, transform_indices = @transform_4, window_bounds = array<i64: 48, 24>}, {pipeline_mode = #tpu.pipeline_mode<synchronous>, transform_indices = @transform_5, window_bounds = array<i64: 48, 56>}, {pipeline_mode = #tpu.pipeline_mode<synchronous>, transform_indices = @transform_6, window_bounds = array<i64: 5, 8, 24>}, {pipeline_mode = #tpu.pipeline_mode<synchronous>, transform_indices = @transform_7, window_bounds = array<i64: 12, 56>}, {transform_indices = @transform_8, window_bounds = array<i64: 1, 12, 256>}]} {
    %c0 = arith.constant 0 : index
    %c0_0 = arith.constant 0 : index
    %c0_1 = arith.constant 0 : index
    %0 = vector.load %arg1[%c0, %c0_0, %c0_1] : memref<1x12x256xf32, #tpu.memory_space<vmem>>, vector<1x12x256xf32>
    %1 = vector.shape_cast %0 : vector<1x12x256xf32> to vector<12x256xf32>
    %c0_2 = arith.constant 0 : index
    %c0_3 = arith.constant 0 : index
    %2 = vector.load %arg2[%c0_2, %c0_3] : memref<48x12xf32, #tpu.memory_space<vmem>>, vector<48x12xf32>
    %cst = arith.constant dense<0.000000e+00> : vector<48x256xf32>
    %3 = tpu.matmul %2, %1, %cst {dimension_numbers = #tpu.dot_dimension_numbers<[1], [0], [0], [1], [0, 0, 1, 1], [], []>} : vector<48x12xf32>, vector<12x256xf32>, vector<48x256xf32> -> vector<48x256xf32>
    %cst_4 = arith.constant dense<0.000000e+00> : vector<48xf32>
    %4 = vector.multi_reduction <add>, %3, %cst_4 [1] : vector<48x256xf32> to vector<48xf32>
    %5 = vector.shape_cast %4 : vector<48xf32> to vector<48x1xf32>
    %cst_5 = arith.constant 2.560000e+02 : f32
    %6 = vector.broadcast %cst_5 : f32 to vector<48x1xf32>
    %7 = arith.divf %5, %6 : vector<48x1xf32>
    %8 = arith.mulf %3, %3 : vector<48x256xf32>
    %cst_6 = arith.constant dense<0.000000e+00> : vector<48xf32>
    %9 = vector.multi_reduction <add>, %8, %cst_6 [1] : vector<48x256xf32> to vector<48xf32>
    %10 = vector.shape_cast %9 : vector<48xf32> to vector<48x1xf32>
    %cst_7 = arith.constant 2.560000e+02 : f32
    %11 = vector.broadcast %cst_7 : f32 to vector<48x1xf32>
    %12 = arith.divf %10, %11 : vector<48x1xf32>
    %13 = arith.mulf %7, %7 : vector<48x1xf32>
    %14 = arith.subf %12, %13 : vector<48x1xf32>
    %cst_8 = arith.constant 0.000000e+00 : f32
    %15 = vector.broadcast %cst_8 : f32 to vector<48x1xf32>
    %16 = arith.maximumf %14, %15 : vector<48x1xf32>
    %17 = vector.broadcast %7 : vector<48x1xf32> to vector<48x256xf32>
    %18 = arith.subf %3, %17 : vector<48x256xf32>
    %cst_9 = arith.constant 9.99999974E-6 : f32
    %19 = vector.broadcast %cst_9 : f32 to vector<48x1xf32>
    %20 = arith.addf %16, %19 : vector<48x1xf32>
    %21 = math.rsqrt %20 : vector<48x1xf32>
    %22 = vector.broadcast %21 : vector<48x1xf32> to vector<48x256xf32>
    %23 = arith.mulf %18, %22 : vector<48x256xf32>
    %cst_10 = arith.constant 0.000000e+00 : f32
    %24 = vector.broadcast %cst_10 : f32 to vector<48x256xf32>
    %25 = arith.maximumf %23, %24 : vector<48x256xf32>
    %26 = tpu.iota {dimensions = array<i32: 1>} : vector<8x256xi32>
    %c16_i32 = arith.constant 16 : i32
    %c0_i32 = arith.constant 0 : i32
    %27 = arith.cmpi eq, %c16_i32, %c0_i32 : i32
    %c1_i32 = arith.constant 1 : i32
    %28 = arith.select %27, %c1_i32, %c16_i32 : i32
    %29 = vector.broadcast %28 : i32 to vector<8x256xi32>
    %30 = arith.remsi %26, %29 : vector<8x256xi32>
    %c0_i32_11 = arith.constant 0 : i32
    %31 = vector.broadcast %c0_i32_11 : i32 to vector<8x256xi32>
    %32 = arith.cmpi ne, %30, %31 : vector<8x256xi32>
    %c0_i32_12 = arith.constant 0 : i32
    %33 = vector.broadcast %c0_i32_12 : i32 to vector<8x256xi32>
    %34 = arith.cmpi slt, %30, %33 : vector<8x256xi32>
    %c0_i32_13 = arith.constant 0 : i32
    %35 = arith.cmpi slt, %28, %c0_i32_13 : i32
    %36 = vector.broadcast %35 : i1 to vector<8x256xi1>
    %37 = vector.broadcast %36 : vector<8x256xi1> to vector<8x256xi1>
    %38 = arith.xori %34, %37 : vector<8x256xi1>
    %39 = arith.andi %38, %32 : vector<8x256xi1>
    %40 = vector.broadcast %28 : i32 to vector<8x256xi32>
    %41 = arith.addi %30, %40 : vector<8x256xi32>
    %42 = arith.select %39, %41, %30 : vector<8x256xi1>, vector<8x256xi32>
    %c0_i32_14 = arith.constant 0 : i32
    %43 = vector.broadcast %c0_i32_14 : i32 to vector<8x256xi32>
    %44 = arith.cmpi eq, %42, %43 : vector<8x256xi32>
    %c16_i32_15 = arith.constant 16 : i32
    %c0_i32_16 = arith.constant 0 : i32
    %45 = arith.cmpi eq, %c16_i32_15, %c0_i32_16 : i32
    %c1_i32_17 = arith.constant 1 : i32
    %46 = arith.select %45, %c1_i32_17, %c16_i32_15 : i32
    %47 = vector.broadcast %46 : i32 to vector<8x256xi32>
    %48 = arith.remsi %26, %47 : vector<8x256xi32>
    %c0_i32_18 = arith.constant 0 : i32
    %49 = vector.broadcast %c0_i32_18 : i32 to vector<8x256xi32>
    %50 = arith.cmpi ne, %48, %49 : vector<8x256xi32>
    %c0_i32_19 = arith.constant 0 : i32
    %51 = vector.broadcast %c0_i32_19 : i32 to vector<8x256xi32>
    %52 = arith.cmpi slt, %48, %51 : vector<8x256xi32>
    %c0_i32_20 = arith.constant 0 : i32
    %53 = arith.cmpi slt, %46, %c0_i32_20 : i32
    %54 = vector.broadcast %53 : i1 to vector<8x256xi1>
    %55 = vector.broadcast %54 : vector<8x256xi1> to vector<8x256xi1>
    %56 = arith.xori %52, %55 : vector<8x256xi1>
    %57 = arith.andi %56, %50 : vector<8x256xi1>
    %58 = vector.broadcast %46 : i32 to vector<8x256xi32>
    %59 = arith.addi %48, %58 : vector<8x256xi32>
    %60 = arith.select %57, %59, %48 : vector<8x256xi1>, vector<8x256xi32>
    %c15_i32 = arith.constant 15 : i32
    %61 = vector.broadcast %c15_i32 : i32 to vector<8x256xi32>
    %62 = arith.cmpi eq, %60, %61 : vector<8x256xi32>
    %c16_i32_21 = arith.constant 16 : i32
    %63 = vector.broadcast %c16_i32_21 : i32 to vector<8x256xi32>
    %64 = arith.cmpi slt, %26, %63 : vector<8x256xi32>
    %c240_i32 = arith.constant 240 : i32
    %65 = vector.broadcast %c240_i32 : i32 to vector<8x256xi32>
    %66 = arith.cmpi sge, %26, %65 : vector<8x256xi32>
    %67 = tpu.iota {dimensions = array<i32: 0>} : vector<8x256xi32>
    %c0_i32_22 = arith.constant 0 : i32
    %68 = vector.broadcast %c0_i32_22 : i32 to vector<8x256xi32>
    %69 = arith.cmpi eq, %67, %68 : vector<8x256xi32>
    %cst_23 = arith.constant 1.000000e+00 : f32
    %cst_24 = arith.constant 0.000000e+00 : f32
    %70 = vector.broadcast %cst_23 : f32 to vector<8x256xf32>
    %71 = vector.broadcast %cst_24 : f32 to vector<8x256xf32>
    %72 = arith.select %69, %70, %71 : vector<8x256xi1>, vector<8x256xf32>
    %73 = tpu.iota {dimensions = array<i32: 0>} : vector<8x1xi32>
    %c0_i32_25 = arith.constant 0 : i32
    %74 = vector.broadcast %c0_i32_25 : i32 to vector<8x1xi32>
    %75 = arith.cmpi eq, %73, %74 : vector<8x1xi32>
    %cst_26 = arith.constant 1.000000e+00 : f32
    %cst_27 = arith.constant 0.000000e+00 : f32
    %76 = vector.broadcast %cst_26 : f32 to vector<8x1xf32>
    %77 = vector.broadcast %cst_27 : f32 to vector<8x1xf32>
    %78 = arith.select %75, %76, %77 : vector<8x1xi1>, vector<8x1xf32>
    %79 = vector.extract_strided_slice %25 {offsets = [0, 0], sizes = [8, 256], strides = [1, 1]} : vector<48x256xf32> to vector<8x256xf32>
    %80 = vector.extract_strided_slice %25 {offsets = [8, 0], sizes = [8, 256], strides = [1, 1]} : vector<48x256xf32> to vector<8x256xf32>
    %81 = arith.addf %80, %79 : vector<8x256xf32>
    %c0_28 = arith.constant 0 : index
    %c0_29 = arith.constant 0 : index
    %c0_30 = arith.constant 0 : index
    %82 = vector.load %arg3[%c0_28, %c0_29, %c0_30] : memref<5x8x24xf32, #tpu.memory_space<vmem>>, vector<1x8x24xf32>
    %83 = vector.shape_cast %82 : vector<1x8x24xf32> to vector<8x24xf32>
    %c1_i32_31 = arith.constant 1 : i32
    %84 = tpu.dynamic_rotate %81 by %c1_i32_31 dim 1 : vector<8x256xf32>, i32 -> vector<8x256xf32>
    %cst_32 = arith.constant 0.000000e+00 : f32
    %85 = vector.broadcast %cst_32 : f32 to vector<8x256xf32>
    %86 = arith.select %44, %85, %84 : vector<8x256xi1>, vector<8x256xf32>
    %c255_i32 = arith.constant 255 : i32
    %87 = tpu.dynamic_rotate %81 by %c255_i32 dim 1 : vector<8x256xf32>, i32 -> vector<8x256xf32>
    %cst_33 = arith.constant 0.000000e+00 : f32
    %88 = vector.broadcast %cst_33 : f32 to vector<8x256xf32>
    %89 = arith.select %62, %88, %87 : vector<8x256xi1>, vector<8x256xf32>
    %90 = tpu.concatenate %86, %81, %89 in 0 : vector<8x256xf32>, vector<8x256xf32>, vector<8x256xf32> -> vector<24x256xf32>
    %cst_34 = arith.constant dense<0.000000e+00> : vector<8x256xf32>
    %91 = tpu.matmul %83, %90, %cst_34 {dimension_numbers = #tpu.dot_dimension_numbers<[1], [0], [0], [1], [0, 0, 1, 1], [], []>} : vector<8x24xf32>, vector<24x256xf32>, vector<8x256xf32> -> vector<8x256xf32>
    %cst_35 = arith.constant dense<0.000000e+00> : vector<8xf32>
    %92 = vector.multi_reduction <add>, %91, %cst_35 [1] : vector<8x256xf32> to vector<8xf32>
    %93 = vector.shape_cast %92 : vector<8xf32> to vector<8x1xf32>
    %cst_36 = arith.constant 2.560000e+02 : f32
    %94 = vector.broadcast %cst_36 : f32 to vector<8x1xf32>
    %95 = arith.divf %93, %94 : vector<8x1xf32>
    %96 = arith.mulf %91, %91 : vector<8x256xf32>
    %cst_37 = arith.constant dense<0.000000e+00> : vector<8xf32>
    %97 = vector.multi_reduction <add>, %96, %cst_37 [1] : vector<8x256xf32> to vector<8xf32>
    %98 = vector.shape_cast %97 : vector<8xf32> to vector<8x1xf32>
    %cst_38 = arith.constant 2.560000e+02 : f32
    %99 = vector.broadcast %cst_38 : f32 to vector<8x1xf32>
    %100 = arith.divf %98, %99 : vector<8x1xf32>
    %101 = arith.mulf %95, %95 : vector<8x1xf32>
    %102 = arith.subf %100, %101 : vector<8x1xf32>
    %cst_39 = arith.constant 0.000000e+00 : f32
    %103 = vector.broadcast %cst_39 : f32 to vector<8x1xf32>
    %104 = arith.maximumf %102, %103 : vector<8x1xf32>
    %105 = vector.broadcast %95 : vector<8x1xf32> to vector<8x256xf32>
    %106 = arith.subf %91, %105 : vector<8x256xf32>
    %cst_40 = arith.constant 9.99999974E-6 : f32
    %107 = vector.broadcast %cst_40 : f32 to vector<8x1xf32>
    %108 = arith.addf %104, %107 : vector<8x1xf32>
    %109 = math.rsqrt %108 : vector<8x1xf32>
    %110 = vector.broadcast %109 : vector<8x1xf32> to vector<8x256xf32>
    %111 = arith.mulf %106, %110 : vector<8x256xf32>
    %cst_41 = arith.constant 0.000000e+00 : f32
    %112 = vector.broadcast %cst_41 : f32 to vector<8x256xf32>
    %113 = arith.maximumf %111, %112 : vector<8x256xf32>
    %114 = vector.extract_strided_slice %25 {offsets = [16, 0], sizes = [8, 256], strides = [1, 1]} : vector<48x256xf32> to vector<8x256xf32>
    %115 = arith.addf %114, %113 : vector<8x256xf32>
    %c1 = arith.constant 1 : index
    %c0_42 = arith.constant 0 : index
    %c0_43 = arith.constant 0 : index
    %116 = vector.load %arg3[%c1, %c0_42, %c0_43] : memref<5x8x24xf32, #tpu.memory_space<vmem>>, vector<1x8x24xf32>
    %117 = vector.shape_cast %116 : vector<1x8x24xf32> to vector<8x24xf32>
    %c1_i32_44 = arith.constant 1 : i32
    %118 = tpu.dynamic_rotate %115 by %c1_i32_44 dim 1 : vector<8x256xf32>, i32 -> vector<8x256xf32>
    %cst_45 = arith.constant 0.000000e+00 : f32
    %119 = vector.broadcast %cst_45 : f32 to vector<8x256xf32>
    %120 = arith.select %44, %119, %118 : vector<8x256xi1>, vector<8x256xf32>
    %c255_i32_46 = arith.constant 255 : i32
    %121 = tpu.dynamic_rotate %115 by %c255_i32_46 dim 1 : vector<8x256xf32>, i32 -> vector<8x256xf32>
    %cst_47 = arith.constant 0.000000e+00 : f32
    %122 = vector.broadcast %cst_47 : f32 to vector<8x256xf32>
    %123 = arith.select %62, %122, %121 : vector<8x256xi1>, vector<8x256xf32>
    %124 = tpu.concatenate %120, %115, %123 in 0 : vector<8x256xf32>, vector<8x256xf32>, vector<8x256xf32> -> vector<24x256xf32>
    %cst_48 = arith.constant dense<0.000000e+00> : vector<8x256xf32>
    %125 = tpu.matmul %117, %124, %cst_48 {dimension_numbers = #tpu.dot_dimension_numbers<[1], [0], [0], [1], [0, 0, 1, 1], [], []>} : vector<8x24xf32>, vector<24x256xf32>, vector<8x256xf32> -> vector<8x256xf32>
    %cst_49 = arith.constant dense<0.000000e+00> : vector<8xf32>
    %126 = vector.multi_reduction <add>, %125, %cst_49 [1] : vector<8x256xf32> to vector<8xf32>
    %127 = vector.shape_cast %126 : vector<8xf32> to vector<8x1xf32>
    %cst_50 = arith.constant 2.560000e+02 : f32
    %128 = vector.broadcast %cst_50 : f32 to vector<8x1xf32>
    %129 = arith.divf %127, %128 : vector<8x1xf32>
    %130 = arith.mulf %125, %125 : vector<8x256xf32>
    %cst_51 = arith.constant dense<0.000000e+00> : vector<8xf32>
    %131 = vector.multi_reduction <add>, %130, %cst_51 [1] : vector<8x256xf32> to vector<8xf32>
    %132 = vector.shape_cast %131 : vector<8xf32> to vector<8x1xf32>
    %cst_52 = arith.constant 2.560000e+02 : f32
    %133 = vector.broadcast %cst_52 : f32 to vector<8x1xf32>
    %134 = arith.divf %132, %133 : vector<8x1xf32>
    %135 = arith.mulf %129, %129 : vector<8x1xf32>
    %136 = arith.subf %134, %135 : vector<8x1xf32>
    %cst_53 = arith.constant 0.000000e+00 : f32
    %137 = vector.broadcast %cst_53 : f32 to vector<8x1xf32>
    %138 = arith.maximumf %136, %137 : vector<8x1xf32>
    %139 = vector.broadcast %129 : vector<8x1xf32> to vector<8x256xf32>
    %140 = arith.subf %125, %139 : vector<8x256xf32>
    %cst_54 = arith.constant 9.99999974E-6 : f32
    %141 = vector.broadcast %cst_54 : f32 to vector<8x1xf32>
    %142 = arith.addf %138, %141 : vector<8x1xf32>
    %143 = math.rsqrt %142 : vector<8x1xf32>
    %144 = vector.broadcast %143 : vector<8x1xf32> to vector<8x256xf32>
    %145 = arith.mulf %140, %144 : vector<8x256xf32>
    %cst_55 = arith.constant 0.000000e+00 : f32
    %146 = vector.broadcast %cst_55 : f32 to vector<8x256xf32>
    %147 = arith.maximumf %145, %146 : vector<8x256xf32>
    %148 = vector.extract_strided_slice %25 {offsets = [24, 0], sizes = [8, 256], strides = [1, 1]} : vector<48x256xf32> to vector<8x256xf32>
    %149 = arith.addf %148, %147 : vector<8x256xf32>
    %c2 = arith.constant 2 : index
    %c0_56 = arith.constant 0 : index
    %c0_57 = arith.constant 0 : index
    %150 = vector.load %arg3[%c2, %c0_56, %c0_57] : memref<5x8x24xf32, #tpu.memory_space<vmem>>, vector<1x8x24xf32>
    %151 = vector.shape_cast %150 : vector<1x8x24xf32> to vector<8x24xf32>
    %c1_i32_58 = arith.constant 1 : i32
    %152 = tpu.dynamic_rotate %149 by %c1_i32_58 dim 1 : vector<8x256xf32>, i32 -> vector<8x256xf32>
    %cst_59 = arith.constant 0.000000e+00 : f32
    %153 = vector.broadcast %cst_59 : f32 to vector<8x256xf32>
    %154 = arith.select %44, %153, %152 : vector<8x256xi1>, vector<8x256xf32>
    %c255_i32_60 = arith.constant 255 : i32
    %155 = tpu.dynamic_rotate %149 by %c255_i32_60 dim 1 : vector<8x256xf32>, i32 -> vector<8x256xf32>
    %cst_61 = arith.constant 0.000000e+00 : f32
    %156 = vector.broadcast %cst_61 : f32 to vector<8x256xf32>
    %157 = arith.select %62, %156, %155 : vector<8x256xi1>, vector<8x256xf32>
    %158 = tpu.concatenate %154, %149, %157 in 0 : vector<8x256xf32>, vector<8x256xf32>, vector<8x256xf32> -> vector<24x256xf32>
    %cst_62 = arith.constant dense<0.000000e+00> : vector<8x256xf32>
    %159 = tpu.matmul %151, %158, %cst_62 {dimension_numbers = #tpu.dot_dimension_numbers<[1], [0], [0], [1], [0, 0, 1, 1], [], []>} : vector<8x24xf32>, vector<24x256xf32>, vector<8x256xf32> -> vector<8x256xf32>
    %cst_63 = arith.constant dense<0.000000e+00> : vector<8xf32>
    %160 = vector.multi_reduction <add>, %159, %cst_63 [1] : vector<8x256xf32> to vector<8xf32>
    %161 = vector.shape_cast %160 : vector<8xf32> to vector<8x1xf32>
    %cst_64 = arith.constant 2.560000e+02 : f32
    %162 = vector.broadcast %cst_64 : f32 to vector<8x1xf32>
    %163 = arith.divf %161, %162 : vector<8x1xf32>
    %164 = arith.mulf %159, %159 : vector<8x256xf32>
    %cst_65 = arith.constant dense<0.000000e+00> : vector<8xf32>
    %165 = vector.multi_reduction <add>, %164, %cst_65 [1] : vector<8x256xf32> to vector<8xf32>
    %166 = vector.shape_cast %165 : vector<8xf32> to vector<8x1xf32>
    %cst_66 = arith.constant 2.560000e+02 : f32
    %167 = vector.broadcast %cst_66 : f32 to vector<8x1xf32>
    %168 = arith.divf %166, %167 : vector<8x1xf32>
    %169 = arith.mulf %163, %163 : vector<8x1xf32>
    %170 = arith.subf %168, %169 : vector<8x1xf32>
    %cst_67 = arith.constant 0.000000e+00 : f32
    %171 = vector.broadcast %cst_67 : f32 to vector<8x1xf32>
    %172 = arith.maximumf %170, %171 : vector<8x1xf32>
    %173 = vector.broadcast %163 : vector<8x1xf32> to vector<8x256xf32>
    %174 = arith.subf %159, %173 : vector<8x256xf32>
    %cst_68 = arith.constant 9.99999974E-6 : f32
    %175 = vector.broadcast %cst_68 : f32 to vector<8x1xf32>
    %176 = arith.addf %172, %175 : vector<8x1xf32>
    %177 = math.rsqrt %176 : vector<8x1xf32>
    %178 = vector.broadcast %177 : vector<8x1xf32> to vector<8x256xf32>
    %179 = arith.mulf %174, %178 : vector<8x256xf32>
    %cst_69 = arith.constant 0.000000e+00 : f32
    %180 = vector.broadcast %cst_69 : f32 to vector<8x256xf32>
    %181 = arith.maximumf %179, %180 : vector<8x256xf32>
    %182 = vector.extract_strided_slice %25 {offsets = [32, 0], sizes = [8, 256], strides = [1, 1]} : vector<48x256xf32> to vector<8x256xf32>
    %183 = arith.addf %182, %181 : vector<8x256xf32>
    %c3 = arith.constant 3 : index
    %c0_70 = arith.constant 0 : index
    %c0_71 = arith.constant 0 : index
    %184 = vector.load %arg3[%c3, %c0_70, %c0_71] : memref<5x8x24xf32, #tpu.memory_space<vmem>>, vector<1x8x24xf32>
    %185 = vector.shape_cast %184 : vector<1x8x24xf32> to vector<8x24xf32>
    %c1_i32_72 = arith.constant 1 : i32
    %186 = tpu.dynamic_rotate %183 by %c1_i32_72 dim 1 : vector<8x256xf32>, i32 -> vector<8x256xf32>
    %cst_73 = arith.constant 0.000000e+00 : f32
    %187 = vector.broadcast %cst_73 : f32 to vector<8x256xf32>
    %188 = arith.select %44, %187, %186 : vector<8x256xi1>, vector<8x256xf32>
    %c255_i32_74 = arith.constant 255 : i32
    %189 = tpu.dynamic_rotate %183 by %c255_i32_74 dim 1 : vector<8x256xf32>, i32 -> vector<8x256xf32>
    %cst_75 = arith.constant 0.000000e+00 : f32
    %190 = vector.broadcast %cst_75 : f32 to vector<8x256xf32>
    %191 = arith.select %62, %190, %189 : vector<8x256xi1>, vector<8x256xf32>
    %192 = tpu.concatenate %188, %183, %191 in 0 : vector<8x256xf32>, vector<8x256xf32>, vector<8x256xf32> -> vector<24x256xf32>
    %cst_76 = arith.constant dense<0.000000e+00> : vector<8x256xf32>
    %193 = tpu.matmul %185, %192, %cst_76 {dimension_numbers = #tpu.dot_dimension_numbers<[1], [0], [0], [1], [0, 0, 1, 1], [], []>} : vector<8x24xf32>, vector<24x256xf32>, vector<8x256xf32> -> vector<8x256xf32>
    %cst_77 = arith.constant dense<0.000000e+00> : vector<8xf32>
    %194 = vector.multi_reduction <add>, %193, %cst_77 [1] : vector<8x256xf32> to vector<8xf32>
    %195 = vector.shape_cast %194 : vector<8xf32> to vector<8x1xf32>
    %cst_78 = arith.constant 2.560000e+02 : f32
    %196 = vector.broadcast %cst_78 : f32 to vector<8x1xf32>
    %197 = arith.divf %195, %196 : vector<8x1xf32>
    %198 = arith.mulf %193, %193 : vector<8x256xf32>
    %cst_79 = arith.constant dense<0.000000e+00> : vector<8xf32>
    %199 = vector.multi_reduction <add>, %198, %cst_79 [1] : vector<8x256xf32> to vector<8xf32>
    %200 = vector.shape_cast %199 : vector<8xf32> to vector<8x1xf32>
    %cst_80 = arith.constant 2.560000e+02 : f32
    %201 = vector.broadcast %cst_80 : f32 to vector<8x1xf32>
    %202 = arith.divf %200, %201 : vector<8x1xf32>
    %203 = arith.mulf %197, %197 : vector<8x1xf32>
    %204 = arith.subf %202, %203 : vector<8x1xf32>
    %cst_81 = arith.constant 0.000000e+00 : f32
    %205 = vector.broadcast %cst_81 : f32 to vector<8x1xf32>
    %206 = arith.maximumf %204, %205 : vector<8x1xf32>
    %207 = vector.broadcast %197 : vector<8x1xf32> to vector<8x256xf32>
    %208 = arith.subf %193, %207 : vector<8x256xf32>
    %cst_82 = arith.constant 9.99999974E-6 : f32
    %209 = vector.broadcast %cst_82 : f32 to vector<8x1xf32>
    %210 = arith.addf %206, %209 : vector<8x1xf32>
    %211 = math.rsqrt %210 : vector<8x1xf32>
    %212 = vector.broadcast %211 : vector<8x1xf32> to vector<8x256xf32>
    %213 = arith.mulf %208, %212 : vector<8x256xf32>
    %cst_83 = arith.constant 0.000000e+00 : f32
    %214 = vector.broadcast %cst_83 : f32 to vector<8x256xf32>
    %215 = arith.maximumf %213, %214 : vector<8x256xf32>
    %216 = vector.extract_strided_slice %25 {offsets = [40, 0], sizes = [8, 256], strides = [1, 1]} : vector<48x256xf32> to vector<8x256xf32>
    %217 = arith.addf %216, %215 : vector<8x256xf32>
    %c4 = arith.constant 4 : index
    %c0_84 = arith.constant 0 : index
    %c0_85 = arith.constant 0 : index
    %218 = vector.load %arg3[%c4, %c0_84, %c0_85] : memref<5x8x24xf32, #tpu.memory_space<vmem>>, vector<1x8x24xf32>
    %219 = vector.shape_cast %218 : vector<1x8x24xf32> to vector<8x24xf32>
    %c1_i32_86 = arith.constant 1 : i32
    %220 = tpu.dynamic_rotate %217 by %c1_i32_86 dim 1 : vector<8x256xf32>, i32 -> vector<8x256xf32>
    %cst_87 = arith.constant 0.000000e+00 : f32
    %221 = vector.broadcast %cst_87 : f32 to vector<8x256xf32>
    %222 = arith.select %44, %221, %220 : vector<8x256xi1>, vector<8x256xf32>
    %c255_i32_88 = arith.constant 255 : i32
    %223 = tpu.dynamic_rotate %217 by %c255_i32_88 dim 1 : vector<8x256xf32>, i32 -> vector<8x256xf32>
    %cst_89 = arith.constant 0.000000e+00 : f32
    %224 = vector.broadcast %cst_89 : f32 to vector<8x256xf32>
    %225 = arith.select %62, %224, %223 : vector<8x256xi1>, vector<8x256xf32>
    %226 = tpu.concatenate %222, %217, %225 in 0 : vector<8x256xf32>, vector<8x256xf32>, vector<8x256xf32> -> vector<24x256xf32>
    %cst_90 = arith.constant dense<0.000000e+00> : vector<8x256xf32>
    %227 = tpu.matmul %219, %226, %cst_90 {dimension_numbers = #tpu.dot_dimension_numbers<[1], [0], [0], [1], [0, 0, 1, 1], [], []>} : vector<8x24xf32>, vector<24x256xf32>, vector<8x256xf32> -> vector<8x256xf32>
    %cst_91 = arith.constant dense<0.000000e+00> : vector<8xf32>
    %228 = vector.multi_reduction <add>, %227, %cst_91 [1] : vector<8x256xf32> to vector<8xf32>
    %229 = vector.shape_cast %228 : vector<8xf32> to vector<8x1xf32>
    %cst_92 = arith.constant 2.560000e+02 : f32
    %230 = vector.broadcast %cst_92 : f32 to vector<8x1xf32>
    %231 = arith.divf %229, %230 : vector<8x1xf32>
    %232 = arith.mulf %227, %227 : vector<8x256xf32>
    %cst_93 = arith.constant dense<0.000000e+00> : vector<8xf32>
    %233 = vector.multi_reduction <add>, %232, %cst_93 [1] : vector<8x256xf32> to vector<8xf32>
    %234 = vector.shape_cast %233 : vector<8xf32> to vector<8x1xf32>
    %cst_94 = arith.constant 2.560000e+02 : f32
    %235 = vector.broadcast %cst_94 : f32 to vector<8x1xf32>
    %236 = arith.divf %234, %235 : vector<8x1xf32>
    %237 = arith.mulf %231, %231 : vector<8x1xf32>
    %238 = arith.subf %236, %237 : vector<8x1xf32>
    %cst_95 = arith.constant 0.000000e+00 : f32
    %239 = vector.broadcast %cst_95 : f32 to vector<8x1xf32>
    %240 = arith.maximumf %238, %239 : vector<8x1xf32>
    %241 = vector.broadcast %231 : vector<8x1xf32> to vector<8x256xf32>
    %242 = arith.subf %227, %241 : vector<8x256xf32>
    %cst_96 = arith.constant 9.99999974E-6 : f32
    %243 = vector.broadcast %cst_96 : f32 to vector<8x1xf32>
    %244 = arith.addf %240, %243 : vector<8x1xf32>
    %245 = math.rsqrt %244 : vector<8x1xf32>
    %246 = vector.broadcast %245 : vector<8x1xf32> to vector<8x256xf32>
    %247 = arith.mulf %242, %246 : vector<8x256xf32>
    %cst_97 = arith.constant 0.000000e+00 : f32
    %248 = vector.broadcast %cst_97 : f32 to vector<8x256xf32>
    %249 = arith.maximumf %247, %248 : vector<8x256xf32>
    %250 = arith.addf %79, %113 : vector<8x256xf32>
    %251 = arith.addf %250, %147 : vector<8x256xf32>
    %252 = arith.addf %251, %181 : vector<8x256xf32>
    %253 = arith.addf %252, %215 : vector<8x256xf32>
    %254 = arith.addf %253, %249 : vector<8x256xf32>
    %cst_98 = arith.constant dense<0.000000e+00> : vector<8xf32>
    %255 = vector.multi_reduction <add>, %254, %cst_98 [1] : vector<8x256xf32> to vector<8xf32>
    %256 = vector.shape_cast %255 : vector<8xf32> to vector<8x1xf32>
    %cst_99 = arith.constant 2.560000e+02 : f32
    %257 = vector.broadcast %cst_99 : f32 to vector<8x1xf32>
    %258 = arith.divf %256, %257 : vector<8x1xf32>
    %c0_100 = arith.constant 0 : index
    %c0_101 = arith.constant 0 : index
    %259 = vector.load %arg4[%c0_100, %c0_101] : memref<16x16xf32, #tpu.memory_space<vmem>>, vector<16x16xf32>
    %260 = tpu.concatenate %258, %78 in 0 : vector<8x1xf32>, vector<8x1xf32> -> vector<16x1xf32>
    %cst_102 = arith.constant dense<0.000000e+00> : vector<16x1xf32>
    %261 = tpu.matmul %259, %260, %cst_102 {dimension_numbers = #tpu.dot_dimension_numbers<[1], [0], [0], [1], [0, 0, 1, 1], [], []>} : vector<16x16xf32>, vector<16x1xf32>, vector<16x1xf32> -> vector<16x1xf32>
    %c0_103 = arith.constant 0 : index
    %c0_104 = arith.constant 0 : index
    %262 = vector.load %arg5[%c0_103, %c0_104] : memref<48x24xf32, #tpu.memory_space<vmem>>, vector<48x24xf32>
    %263 = tpu.concatenate %261, %78 in 0 : vector<16x1xf32>, vector<8x1xf32> -> vector<24x1xf32>
    %cst_105 = arith.constant dense<0.000000e+00> : vector<48x1xf32>
    %264 = tpu.matmul %262, %263, %cst_105 {dimension_numbers = #tpu.dot_dimension_numbers<[1], [0], [0], [1], [0, 0, 1, 1], [], []>} : vector<48x24xf32>, vector<24x1xf32>, vector<48x1xf32> -> vector<48x1xf32>
    %265 = vector.extract_strided_slice %264 {offsets = [0, 0], sizes = [8, 1], strides = [1, 1]} : vector<48x1xf32> to vector<8x1xf32>
    %266 = vector.extract_strided_slice %264 {offsets = [8, 0], sizes = [8, 1], strides = [1, 1]} : vector<48x1xf32> to vector<8x1xf32>
    %267 = vector.extract_strided_slice %264 {offsets = [16, 0], sizes = [8, 1], strides = [1, 1]} : vector<48x1xf32> to vector<8x1xf32>
    %268 = vector.extract_strided_slice %264 {offsets = [24, 0], sizes = [8, 1], strides = [1, 1]} : vector<48x1xf32> to vector<8x1xf32>
    %269 = vector.extract_strided_slice %264 {offsets = [32, 0], sizes = [8, 1], strides = [1, 1]} : vector<48x1xf32> to vector<8x1xf32>
    %270 = vector.extract_strided_slice %264 {offsets = [40, 0], sizes = [8, 1], strides = [1, 1]} : vector<48x1xf32> to vector<8x1xf32>
    %271 = arith.maximumf %265, %266 : vector<8x1xf32>
    %272 = arith.maximumf %267, %268 : vector<8x1xf32>
    %273 = arith.maximumf %271, %272 : vector<8x1xf32>
    %274 = arith.maximumf %269, %270 : vector<8x1xf32>
    %275 = arith.maximumf %273, %274 : vector<8x1xf32>
    %276 = arith.subf %265, %275 : vector<8x1xf32>
    %277 = math.exp %276 : vector<8x1xf32>
    %278 = arith.subf %266, %275 : vector<8x1xf32>
    %279 = math.exp %278 : vector<8x1xf32>
    %280 = arith.subf %267, %275 : vector<8x1xf32>
    %281 = math.exp %280 : vector<8x1xf32>
    %282 = arith.subf %268, %275 : vector<8x1xf32>
    %283 = math.exp %282 : vector<8x1xf32>
    %284 = arith.subf %269, %275 : vector<8x1xf32>
    %285 = math.exp %284 : vector<8x1xf32>
    %286 = arith.subf %270, %275 : vector<8x1xf32>
    %287 = math.exp %286 : vector<8x1xf32>
    %288 = arith.addf %277, %279 : vector<8x1xf32>
    %289 = arith.addf %288, %281 : vector<8x1xf32>
    %290 = arith.addf %289, %283 : vector<8x1xf32>
    %291 = arith.addf %290, %285 : vector<8x1xf32>
    %292 = arith.addf %291, %287 : vector<8x1xf32>
    %cst_106 = arith.constant 1.000000e+00 : f32
    %293 = vector.broadcast %cst_106 : f32 to vector<8x1xf32>
    %294 = arith.divf %293, %292 : vector<8x1xf32>
    %295 = arith.mulf %277, %294 : vector<8x1xf32>
    %296 = arith.mulf %279, %294 : vector<8x1xf32>
    %297 = arith.mulf %281, %294 : vector<8x1xf32>
    %298 = arith.mulf %283, %294 : vector<8x1xf32>
    %299 = arith.mulf %285, %294 : vector<8x1xf32>
    %300 = arith.mulf %287, %294 : vector<8x1xf32>
    %301 = vector.broadcast %295 : vector<8x1xf32> to vector<8x256xf32>
    %302 = arith.mulf %79, %301 : vector<8x256xf32>
    %303 = vector.broadcast %296 : vector<8x1xf32> to vector<8x256xf32>
    %304 = arith.mulf %113, %303 : vector<8x256xf32>
    %305 = vector.broadcast %297 : vector<8x1xf32> to vector<8x256xf32>
    %306 = arith.mulf %147, %305 : vector<8x256xf32>
    %307 = vector.broadcast %298 : vector<8x1xf32> to vector<8x256xf32>
    %308 = arith.mulf %181, %307 : vector<8x256xf32>
    %309 = vector.broadcast %299 : vector<8x1xf32> to vector<8x256xf32>
    %310 = arith.mulf %215, %309 : vector<8x256xf32>
    %311 = vector.broadcast %300 : vector<8x1xf32> to vector<8x256xf32>
    %312 = arith.mulf %249, %311 : vector<8x256xf32>
    %313 = tpu.concatenate %302, %304, %306, %308, %310, %312, %72 in 0 : vector<8x256xf32>, vector<8x256xf32>, vector<8x256xf32>, vector<8x256xf32>, vector<8x256xf32>, vector<8x256xf32>, vector<8x256xf32> -> vector<56x256xf32>
    %c0_107 = arith.constant 0 : index
    %c0_108 = arith.constant 0 : index
    %314 = vector.load %arg6[%c0_107, %c0_108] : memref<48x56xf32, #tpu.memory_space<vmem>>, vector<48x56xf32>
    %cst_109 = arith.constant dense<0.000000e+00> : vector<48x256xf32>
    %315 = tpu.matmul %314, %313, %cst_109 {dimension_numbers = #tpu.dot_dimension_numbers<[1], [0], [0], [1], [0, 0, 1, 1], [], []>} : vector<48x56xf32>, vector<56x256xf32>, vector<48x256xf32> -> vector<48x256xf32>
    %316 = vector.extract_strided_slice %315 {offsets = [0, 0], sizes = [8, 256], strides = [1, 1]} : vector<48x256xf32> to vector<8x256xf32>
    %317 = vector.extract_strided_slice %315 {offsets = [8, 0], sizes = [8, 256], strides = [1, 1]} : vector<48x256xf32> to vector<8x256xf32>
    %c0_110 = arith.constant 0 : index
    %c0_111 = arith.constant 0 : index
    %c0_112 = arith.constant 0 : index
    %318 = vector.load %arg7[%c0_110, %c0_111, %c0_112] : memref<5x8x24xf32, #tpu.memory_space<vmem>>, vector<1x8x24xf32>
    %319 = vector.shape_cast %318 : vector<1x8x24xf32> to vector<8x24xf32>
    %c16_i32_113 = arith.constant 16 : i32
    %320 = tpu.dynamic_rotate %317 by %c16_i32_113 dim 1 : vector<8x256xf32>, i32 -> vector<8x256xf32>
    %cst_114 = arith.constant 0.000000e+00 : f32
    %321 = vector.broadcast %cst_114 : f32 to vector<8x256xf32>
    %322 = arith.select %64, %321, %320 : vector<8x256xi1>, vector<8x256xf32>
    %c240_i32_115 = arith.constant 240 : i32
    %323 = tpu.dynamic_rotate %317 by %c240_i32_115 dim 1 : vector<8x256xf32>, i32 -> vector<8x256xf32>
    %cst_116 = arith.constant 0.000000e+00 : f32
    %324 = vector.broadcast %cst_116 : f32 to vector<8x256xf32>
    %325 = arith.select %66, %324, %323 : vector<8x256xi1>, vector<8x256xf32>
    %326 = tpu.concatenate %322, %317, %325 in 0 : vector<8x256xf32>, vector<8x256xf32>, vector<8x256xf32> -> vector<24x256xf32>
    %cst_117 = arith.constant dense<0.000000e+00> : vector<8x256xf32>
    %327 = tpu.matmul %319, %326, %cst_117 {dimension_numbers = #tpu.dot_dimension_numbers<[1], [0], [0], [1], [0, 0, 1, 1], [], []>} : vector<8x24xf32>, vector<24x256xf32>, vector<8x256xf32> -> vector<8x256xf32>
    %cst_118 = arith.constant dense<0.000000e+00> : vector<8xf32>
    %328 = vector.multi_reduction <add>, %327, %cst_118 [1] : vector<8x256xf32> to vector<8xf32>
    %329 = vector.shape_cast %328 : vector<8xf32> to vector<8x1xf32>
    %cst_119 = arith.constant 2.560000e+02 : f32
    %330 = vector.broadcast %cst_119 : f32 to vector<8x1xf32>
    %331 = arith.divf %329, %330 : vector<8x1xf32>
    %332 = arith.mulf %327, %327 : vector<8x256xf32>
    %cst_120 = arith.constant dense<0.000000e+00> : vector<8xf32>
    %333 = vector.multi_reduction <add>, %332, %cst_120 [1] : vector<8x256xf32> to vector<8xf32>
    %334 = vector.shape_cast %333 : vector<8xf32> to vector<8x1xf32>
    %cst_121 = arith.constant 2.560000e+02 : f32
    %335 = vector.broadcast %cst_121 : f32 to vector<8x1xf32>
    %336 = arith.divf %334, %335 : vector<8x1xf32>
    %337 = arith.mulf %331, %331 : vector<8x1xf32>
    %338 = arith.subf %336, %337 : vector<8x1xf32>
    %cst_122 = arith.constant 0.000000e+00 : f32
    %339 = vector.broadcast %cst_122 : f32 to vector<8x1xf32>
    %340 = arith.maximumf %338, %339 : vector<8x1xf32>
    %341 = vector.broadcast %331 : vector<8x1xf32> to vector<8x256xf32>
    %342 = arith.subf %327, %341 : vector<8x256xf32>
    %cst_123 = arith.constant 9.99999974E-6 : f32
    %343 = vector.broadcast %cst_123 : f32 to vector<8x1xf32>
    %344 = arith.addf %340, %343 : vector<8x1xf32>
    %345 = math.rsqrt %344 : vector<8x1xf32>
    %346 = vector.broadcast %345 : vector<8x1xf32> to vector<8x256xf32>
    %347 = arith.mulf %342, %346 : vector<8x256xf32>
    %cst_124 = arith.constant 0.000000e+00 : f32
    %348 = vector.broadcast %cst_124 : f32 to vector<8x256xf32>
    %349 = arith.maximumf %347, %348 : vector<8x256xf32>
    %350 = vector.extract_strided_slice %315 {offsets = [16, 0], sizes = [8, 256], strides = [1, 1]} : vector<48x256xf32> to vector<8x256xf32>
    %351 = arith.addf %349, %350 : vector<8x256xf32>
    %c1_125 = arith.constant 1 : index
    %c0_126 = arith.constant 0 : index
    %c0_127 = arith.constant 0 : index
    %352 = vector.load %arg7[%c1_125, %c0_126, %c0_127] : memref<5x8x24xf32, #tpu.memory_space<vmem>>, vector<1x8x24xf32>
    %353 = vector.shape_cast %352 : vector<1x8x24xf32> to vector<8x24xf32>
    %c16_i32_128 = arith.constant 16 : i32
    %354 = tpu.dynamic_rotate %351 by %c16_i32_128 dim 1 : vector<8x256xf32>, i32 -> vector<8x256xf32>
    %cst_129 = arith.constant 0.000000e+00 : f32
    %355 = vector.broadcast %cst_129 : f32 to vector<8x256xf32>
    %356 = arith.select %64, %355, %354 : vector<8x256xi1>, vector<8x256xf32>
    %c240_i32_130 = arith.constant 240 : i32
    %357 = tpu.dynamic_rotate %351 by %c240_i32_130 dim 1 : vector<8x256xf32>, i32 -> vector<8x256xf32>
    %cst_131 = arith.constant 0.000000e+00 : f32
    %358 = vector.broadcast %cst_131 : f32 to vector<8x256xf32>
    %359 = arith.select %66, %358, %357 : vector<8x256xi1>, vector<8x256xf32>
    %360 = tpu.concatenate %356, %351, %359 in 0 : vector<8x256xf32>, vector<8x256xf32>, vector<8x256xf32> -> vector<24x256xf32>
    %cst_132 = arith.constant dense<0.000000e+00> : vector<8x256xf32>
    %361 = tpu.matmul %353, %360, %cst_132 {dimension_numbers = #tpu.dot_dimension_numbers<[1], [0], [0], [1], [0, 0, 1, 1], [], []>} : vector<8x24xf32>, vector<24x256xf32>, vector<8x256xf32> -> vector<8x256xf32>
    %cst_133 = arith.constant dense<0.000000e+00> : vector<8xf32>
    %362 = vector.multi_reduction <add>, %361, %cst_133 [1] : vector<8x256xf32> to vector<8xf32>
    %363 = vector.shape_cast %362 : vector<8xf32> to vector<8x1xf32>
    %cst_134 = arith.constant 2.560000e+02 : f32
    %364 = vector.broadcast %cst_134 : f32 to vector<8x1xf32>
    %365 = arith.divf %363, %364 : vector<8x1xf32>
    %366 = arith.mulf %361, %361 : vector<8x256xf32>
    %cst_135 = arith.constant dense<0.000000e+00> : vector<8xf32>
    %367 = vector.multi_reduction <add>, %366, %cst_135 [1] : vector<8x256xf32> to vector<8xf32>
    %368 = vector.shape_cast %367 : vector<8xf32> to vector<8x1xf32>
    %cst_136 = arith.constant 2.560000e+02 : f32
    %369 = vector.broadcast %cst_136 : f32 to vector<8x1xf32>
    %370 = arith.divf %368, %369 : vector<8x1xf32>
    %371 = arith.mulf %365, %365 : vector<8x1xf32>
    %372 = arith.subf %370, %371 : vector<8x1xf32>
    %cst_137 = arith.constant 0.000000e+00 : f32
    %373 = vector.broadcast %cst_137 : f32 to vector<8x1xf32>
    %374 = arith.maximumf %372, %373 : vector<8x1xf32>
    %375 = vector.broadcast %365 : vector<8x1xf32> to vector<8x256xf32>
    %376 = arith.subf %361, %375 : vector<8x256xf32>
    %cst_138 = arith.constant 9.99999974E-6 : f32
    %377 = vector.broadcast %cst_138 : f32 to vector<8x1xf32>
    %378 = arith.addf %374, %377 : vector<8x1xf32>
    %379 = math.rsqrt %378 : vector<8x1xf32>
    %380 = vector.broadcast %379 : vector<8x1xf32> to vector<8x256xf32>
    %381 = arith.mulf %376, %380 : vector<8x256xf32>
    %cst_139 = arith.constant 0.000000e+00 : f32
    %382 = vector.broadcast %cst_139 : f32 to vector<8x256xf32>
    %383 = arith.maximumf %381, %382 : vector<8x256xf32>
    %384 = vector.extract_strided_slice %315 {offsets = [24, 0], sizes = [8, 256], strides = [1, 1]} : vector<48x256xf32> to vector<8x256xf32>
    %385 = arith.addf %383, %384 : vector<8x256xf32>
    %c2_140 = arith.constant 2 : index
    %c0_141 = arith.constant 0 : index
    %c0_142 = arith.constant 0 : index
    %386 = vector.load %arg7[%c2_140, %c0_141, %c0_142] : memref<5x8x24xf32, #tpu.memory_space<vmem>>, vector<1x8x24xf32>
    %387 = vector.shape_cast %386 : vector<1x8x24xf32> to vector<8x24xf32>
    %c16_i32_143 = arith.constant 16 : i32
    %388 = tpu.dynamic_rotate %385 by %c16_i32_143 dim 1 : vector<8x256xf32>, i32 -> vector<8x256xf32>
    %cst_144 = arith.constant 0.000000e+00 : f32
    %389 = vector.broadcast %cst_144 : f32 to vector<8x256xf32>
    %390 = arith.select %64, %389, %388 : vector<8x256xi1>, vector<8x256xf32>
    %c240_i32_145 = arith.constant 240 : i32
    %391 = tpu.dynamic_rotate %385 by %c240_i32_145 dim 1 : vector<8x256xf32>, i32 -> vector<8x256xf32>
    %cst_146 = arith.constant 0.000000e+00 : f32
    %392 = vector.broadcast %cst_146 : f32 to vector<8x256xf32>
    %393 = arith.select %66, %392, %391 : vector<8x256xi1>, vector<8x256xf32>
    %394 = tpu.concatenate %390, %385, %393 in 0 : vector<8x256xf32>, vector<8x256xf32>, vector<8x256xf32> -> vector<24x256xf32>
    %cst_147 = arith.constant dense<0.000000e+00> : vector<8x256xf32>
    %395 = tpu.matmul %387, %394, %cst_147 {dimension_numbers = #tpu.dot_dimension_numbers<[1], [0], [0], [1], [0, 0, 1, 1], [], []>} : vector<8x24xf32>, vector<24x256xf32>, vector<8x256xf32> -> vector<8x256xf32>
    %cst_148 = arith.constant dense<0.000000e+00> : vector<8xf32>
    %396 = vector.multi_reduction <add>, %395, %cst_148 [1] : vector<8x256xf32> to vector<8xf32>
    %397 = vector.shape_cast %396 : vector<8xf32> to vector<8x1xf32>
    %cst_149 = arith.constant 2.560000e+02 : f32
    %398 = vector.broadcast %cst_149 : f32 to vector<8x1xf32>
    %399 = arith.divf %397, %398 : vector<8x1xf32>
    %400 = arith.mulf %395, %395 : vector<8x256xf32>
    %cst_150 = arith.constant dense<0.000000e+00> : vector<8xf32>
    %401 = vector.multi_reduction <add>, %400, %cst_150 [1] : vector<8x256xf32> to vector<8xf32>
    %402 = vector.shape_cast %401 : vector<8xf32> to vector<8x1xf32>
    %cst_151 = arith.constant 2.560000e+02 : f32
    %403 = vector.broadcast %cst_151 : f32 to vector<8x1xf32>
    %404 = arith.divf %402, %403 : vector<8x1xf32>
    %405 = arith.mulf %399, %399 : vector<8x1xf32>
    %406 = arith.subf %404, %405 : vector<8x1xf32>
    %cst_152 = arith.constant 0.000000e+00 : f32
    %407 = vector.broadcast %cst_152 : f32 to vector<8x1xf32>
    %408 = arith.maximumf %406, %407 : vector<8x1xf32>
    %409 = vector.broadcast %399 : vector<8x1xf32> to vector<8x256xf32>
    %410 = arith.subf %395, %409 : vector<8x256xf32>
    %cst_153 = arith.constant 9.99999974E-6 : f32
    %411 = vector.broadcast %cst_153 : f32 to vector<8x1xf32>
    %412 = arith.addf %408, %411 : vector<8x1xf32>
    %413 = math.rsqrt %412 : vector<8x1xf32>
    %414 = vector.broadcast %413 : vector<8x1xf32> to vector<8x256xf32>
    %415 = arith.mulf %410, %414 : vector<8x256xf32>
    %cst_154 = arith.constant 0.000000e+00 : f32
    %416 = vector.broadcast %cst_154 : f32 to vector<8x256xf32>
    %417 = arith.maximumf %415, %416 : vector<8x256xf32>
    %418 = vector.extract_strided_slice %315 {offsets = [32, 0], sizes = [8, 256], strides = [1, 1]} : vector<48x256xf32> to vector<8x256xf32>
    %419 = arith.addf %417, %418 : vector<8x256xf32>
    %c3_155 = arith.constant 3 : index
    %c0_156 = arith.constant 0 : index
    %c0_157 = arith.constant 0 : index
    %420 = vector.load %arg7[%c3_155, %c0_156, %c0_157] : memref<5x8x24xf32, #tpu.memory_space<vmem>>, vector<1x8x24xf32>
    %421 = vector.shape_cast %420 : vector<1x8x24xf32> to vector<8x24xf32>
    %c16_i32_158 = arith.constant 16 : i32
    %422 = tpu.dynamic_rotate %419 by %c16_i32_158 dim 1 : vector<8x256xf32>, i32 -> vector<8x256xf32>
    %cst_159 = arith.constant 0.000000e+00 : f32
    %423 = vector.broadcast %cst_159 : f32 to vector<8x256xf32>
    %424 = arith.select %64, %423, %422 : vector<8x256xi1>, vector<8x256xf32>
    %c240_i32_160 = arith.constant 240 : i32
    %425 = tpu.dynamic_rotate %419 by %c240_i32_160 dim 1 : vector<8x256xf32>, i32 -> vector<8x256xf32>
    %cst_161 = arith.constant 0.000000e+00 : f32
    %426 = vector.broadcast %cst_161 : f32 to vector<8x256xf32>
    %427 = arith.select %66, %426, %425 : vector<8x256xi1>, vector<8x256xf32>
    %428 = tpu.concatenate %424, %419, %427 in 0 : vector<8x256xf32>, vector<8x256xf32>, vector<8x256xf32> -> vector<24x256xf32>
    %cst_162 = arith.constant dense<0.000000e+00> : vector<8x256xf32>
    %429 = tpu.matmul %421, %428, %cst_162 {dimension_numbers = #tpu.dot_dimension_numbers<[1], [0], [0], [1], [0, 0, 1, 1], [], []>} : vector<8x24xf32>, vector<24x256xf32>, vector<8x256xf32> -> vector<8x256xf32>
    %cst_163 = arith.constant dense<0.000000e+00> : vector<8xf32>
    %430 = vector.multi_reduction <add>, %429, %cst_163 [1] : vector<8x256xf32> to vector<8xf32>
    %431 = vector.shape_cast %430 : vector<8xf32> to vector<8x1xf32>
    %cst_164 = arith.constant 2.560000e+02 : f32
    %432 = vector.broadcast %cst_164 : f32 to vector<8x1xf32>
    %433 = arith.divf %431, %432 : vector<8x1xf32>
    %434 = arith.mulf %429, %429 : vector<8x256xf32>
    %cst_165 = arith.constant dense<0.000000e+00> : vector<8xf32>
    %435 = vector.multi_reduction <add>, %434, %cst_165 [1] : vector<8x256xf32> to vector<8xf32>
    %436 = vector.shape_cast %435 : vector<8xf32> to vector<8x1xf32>
    %cst_166 = arith.constant 2.560000e+02 : f32
    %437 = vector.broadcast %cst_166 : f32 to vector<8x1xf32>
    %438 = arith.divf %436, %437 : vector<8x1xf32>
    %439 = arith.mulf %433, %433 : vector<8x1xf32>
    %440 = arith.subf %438, %439 : vector<8x1xf32>
    %cst_167 = arith.constant 0.000000e+00 : f32
    %441 = vector.broadcast %cst_167 : f32 to vector<8x1xf32>
    %442 = arith.maximumf %440, %441 : vector<8x1xf32>
    %443 = vector.broadcast %433 : vector<8x1xf32> to vector<8x256xf32>
    %444 = arith.subf %429, %443 : vector<8x256xf32>
    %cst_168 = arith.constant 9.99999974E-6 : f32
    %445 = vector.broadcast %cst_168 : f32 to vector<8x1xf32>
    %446 = arith.addf %442, %445 : vector<8x1xf32>
    %447 = math.rsqrt %446 : vector<8x1xf32>
    %448 = vector.broadcast %447 : vector<8x1xf32> to vector<8x256xf32>
    %449 = arith.mulf %444, %448 : vector<8x256xf32>
    %cst_169 = arith.constant 0.000000e+00 : f32
    %450 = vector.broadcast %cst_169 : f32 to vector<8x256xf32>
    %451 = arith.maximumf %449, %450 : vector<8x256xf32>
    %452 = vector.extract_strided_slice %315 {offsets = [40, 0], sizes = [8, 256], strides = [1, 1]} : vector<48x256xf32> to vector<8x256xf32>
    %453 = arith.addf %451, %452 : vector<8x256xf32>
    %c4_170 = arith.constant 4 : index
    %c0_171 = arith.constant 0 : index
    %c0_172 = arith.constant 0 : index
    %454 = vector.load %arg7[%c4_170, %c0_171, %c0_172] : memref<5x8x24xf32, #tpu.memory_space<vmem>>, vector<1x8x24xf32>
    %455 = vector.shape_cast %454 : vector<1x8x24xf32> to vector<8x24xf32>
    %c16_i32_173 = arith.constant 16 : i32
    %456 = tpu.dynamic_rotate %453 by %c16_i32_173 dim 1 : vector<8x256xf32>, i32 -> vector<8x256xf32>
    %cst_174 = arith.constant 0.000000e+00 : f32
    %457 = vector.broadcast %cst_174 : f32 to vector<8x256xf32>
    %458 = arith.select %64, %457, %456 : vector<8x256xi1>, vector<8x256xf32>
    %c240_i32_175 = arith.constant 240 : i32
    %459 = tpu.dynamic_rotate %453 by %c240_i32_175 dim 1 : vector<8x256xf32>, i32 -> vector<8x256xf32>
    %cst_176 = arith.constant 0.000000e+00 : f32
    %460 = vector.broadcast %cst_176 : f32 to vector<8x256xf32>
    %461 = arith.select %66, %460, %459 : vector<8x256xi1>, vector<8x256xf32>
    %462 = tpu.concatenate %458, %453, %461 in 0 : vector<8x256xf32>, vector<8x256xf32>, vector<8x256xf32> -> vector<24x256xf32>
    %cst_177 = arith.constant dense<0.000000e+00> : vector<8x256xf32>
    %463 = tpu.matmul %455, %462, %cst_177 {dimension_numbers = #tpu.dot_dimension_numbers<[1], [0], [0], [1], [0, 0, 1, 1], [], []>} : vector<8x24xf32>, vector<24x256xf32>, vector<8x256xf32> -> vector<8x256xf32>
    %cst_178 = arith.constant dense<0.000000e+00> : vector<8xf32>
    %464 = vector.multi_reduction <add>, %463, %cst_178 [1] : vector<8x256xf32> to vector<8xf32>
    %465 = vector.shape_cast %464 : vector<8xf32> to vector<8x1xf32>
    %cst_179 = arith.constant 2.560000e+02 : f32
    %466 = vector.broadcast %cst_179 : f32 to vector<8x1xf32>
    %467 = arith.divf %465, %466 : vector<8x1xf32>
    %468 = arith.mulf %463, %463 : vector<8x256xf32>
    %cst_180 = arith.constant dense<0.000000e+00> : vector<8xf32>
    %469 = vector.multi_reduction <add>, %468, %cst_180 [1] : vector<8x256xf32> to vector<8xf32>
    %470 = vector.shape_cast %469 : vector<8xf32> to vector<8x1xf32>
    %cst_181 = arith.constant 2.560000e+02 : f32
    %471 = vector.broadcast %cst_181 : f32 to vector<8x1xf32>
    %472 = arith.divf %470, %471 : vector<8x1xf32>
    %473 = arith.mulf %467, %467 : vector<8x1xf32>
    %474 = arith.subf %472, %473 : vector<8x1xf32>
    %cst_182 = arith.constant 0.000000e+00 : f32
    %475 = vector.broadcast %cst_182 : f32 to vector<8x1xf32>
    %476 = arith.maximumf %474, %475 : vector<8x1xf32>
    %477 = vector.broadcast %467 : vector<8x1xf32> to vector<8x256xf32>
    %478 = arith.subf %463, %477 : vector<8x256xf32>
    %cst_183 = arith.constant 9.99999974E-6 : f32
    %479 = vector.broadcast %cst_183 : f32 to vector<8x1xf32>
    %480 = arith.addf %476, %479 : vector<8x1xf32>
    %481 = math.rsqrt %480 : vector<8x1xf32>
    %482 = vector.broadcast %481 : vector<8x1xf32> to vector<8x256xf32>
    %483 = arith.mulf %478, %482 : vector<8x256xf32>
    %cst_184 = arith.constant 0.000000e+00 : f32
    %484 = vector.broadcast %cst_184 : f32 to vector<8x256xf32>
    %485 = arith.maximumf %483, %484 : vector<8x256xf32>
    %486 = tpu.concatenate %316, %349, %383, %417, %451, %485, %72 in 0 : vector<8x256xf32>, vector<8x256xf32>, vector<8x256xf32>, vector<8x256xf32>, vector<8x256xf32>, vector<8x256xf32>, vector<8x256xf32> -> vector<56x256xf32>
    %c0_185 = arith.constant 0 : index
    %c0_186 = arith.constant 0 : index
    %487 = vector.load %arg8[%c0_185, %c0_186] : memref<12x56xf32, #tpu.memory_space<vmem>>, vector<12x56xf32>
    %cst_187 = arith.constant dense<0.000000e+00> : vector<12x256xf32>
    %488 = tpu.matmul %487, %486, %cst_187 {dimension_numbers = #tpu.dot_dimension_numbers<[1], [0], [0], [1], [0, 0, 1, 1], [], []>} : vector<12x56xf32>, vector<56x256xf32>, vector<12x256xf32> -> vector<12x256xf32>
    %489 = arith.addf %488, %1 : vector<12x256xf32>
    %cst_188 = arith.constant 0.000000e+00 : f32
    %490 = vector.broadcast %cst_188 : f32 to vector<12x256xf32>
    %491 = arith.maximumf %489, %490 : vector<12x256xf32>
    %c0_189 = arith.constant 0 : index
    %c0_190 = arith.constant 0 : index
    %c0_191 = arith.constant 0 : index
    %492 = vector.load %arg9[%c0_189, %c0_190, %c0_191] : memref<1x12x256xf32, #tpu.memory_space<vmem>>, vector<1x12x256xf32>
    %493 = vector.shape_cast %492 : vector<1x12x256xf32> to vector<12x256xf32>
    %494 = vector.shape_cast %491 : vector<12x256xf32> to vector<1x12x256xf32>
    tpu.vector_store %arg9[%c0_189, %c0_190, %c0_191], %494 {strides = array<i32>} : memref<1x12x256xf32, #tpu.memory_space<vmem>>, vector<1x12x256xf32>,
    return
  }
  func.func @transform_0(%arg0: i32) -> (i32, i32, i32) {
    %c0_i32 = arith.constant 0 : i32
    %c0_i32_0 = arith.constant 0 : i32
    %c0_i32_1 = arith.constant 0 : i32
    return %arg0, %c0_i32, %c0_i32_0 : i32, i32, i32
  }
  func.func @transform_1(%arg0: i32) -> (i32, i32) {
    %c0_i32 = arith.constant 0 : i32
    %c0_i32_0 = arith.constant 0 : i32
    %c0_i32_1 = arith.constant 0 : i32
    return %c0_i32, %c0_i32_0 : i32, i32
  }
  func.func @transform_2(%arg0: i32) -> (i32, i32, i32) {
    %c0_i32 = arith.constant 0 : i32
    %c0_i32_0 = arith.constant 0 : i32
    %c0_i32_1 = arith.constant 0 : i32
    %c0_i32_2 = arith.constant 0 : i32
    return %c0_i32, %c0_i32_0, %c0_i32_1 : i32, i32, i32
  }
  func.func @transform_3(%arg0: i32) -> (i32, i32) {
    %c0_i32 = arith.constant 0 : i32
    %c0_i32_0 = arith.constant 0 : i32
    %c0_i32_1 = arith.constant 0 : i32
    return %c0_i32, %c0_i32_0 : i32, i32
  }
  func.func @transform_4(%arg0: i32) -> (i32, i32) {
    %c0_i32 = arith.constant 0 : i32
    %c0_i32_0 = arith.constant 0 : i32
    %c0_i32_1 = arith.constant 0 : i32
    return %c0_i32, %c0_i32_0 : i32, i32
  }
  func.func @transform_5(%arg0: i32) -> (i32, i32) {
    %c0_i32 = arith.constant 0 : i32
    %c0_i32_0 = arith.constant 0 : i32
    %c0_i32_1 = arith.constant 0 : i32
    return %c0_i32, %c0_i32_0 : i32, i32
  }
  func.func @transform_6(%arg0: i32) -> (i32, i32, i32) {
    %c0_i32 = arith.constant 0 : i32
    %c0_i32_0 = arith.constant 0 : i32
    %c0_i32_1 = arith.constant 0 : i32
    %c0_i32_2 = arith.constant 0 : i32
    return %c0_i32, %c0_i32_0, %c0_i32_1 : i32, i32, i32
  }
  func.func @transform_7(%arg0: i32) -> (i32, i32) {
    %c0_i32 = arith.constant 0 : i32
    %c0_i32_0 = arith.constant 0 : i32
    %c0_i32_1 = arith.constant 0 : i32
    return %c0_i32, %c0_i32_0 : i32, i32
  }
  func.func @transform_8(%arg0: i32) -> (i32, i32, i32) {
    %c0_i32 = arith.constant 0 : i32
    %c0_i32_0 = arith.constant 0 : i32
    %c0_i32_1 = arith.constant 0 : i32
    return %arg0, %c0_i32, %c0_i32_0 : i32, i32, i32
  }
}

</mosaic_0001>

<llo_original>
// kernel: double_conv_forward.1
$region0: #{double_conv_forward.1}
  #allocation0 [shape = 'u32[]', space=smem, size = 0x4, offset = 0x4, fixed_abs, tag = 'smem constant byte address 0x4 - core index']
  #allocation1 [shape = 'u32[72,128]{1,0:T(1,128)}', space=vmem, size = 0x9000, scoped, tag = 'internal scratch']
  %s0 = inlined_call_operand.vmem [shape: f32[2,12,256], index: 0, kind: input, shape index: {}]
  %s1 = inlined_call_operand.vmem [shape: f32[48,12], index: 1, kind: input, shape index: {}]
  %s2 = inlined_call_operand.vmem [shape: f32[5,8,24], index: 2, kind: input, shape index: {}]
  %s3 = inlined_call_operand.vmem [shape: f32[16,16], index: 3, kind: input, shape index: {}]
  %s4 = inlined_call_operand.vmem [shape: f32[48,24], index: 4, kind: input, shape index: {}]
  %s5 = inlined_call_operand.vmem [shape: f32[48,56], index: 5, kind: input, shape index: {}]
  %s6 = inlined_call_operand.vmem [shape: f32[5,8,24], index: 6, kind: input, shape index: {}]
  %s7 = inlined_call_operand.vmem [shape: f32[12,56], index: 7, kind: input, shape index: {}]
  %s8 = inlined_call_operand.vmem [shape: f32[2,12,256], index: 8, kind: output, shape index: {}]
  %s9 = sld [smem:[#allocation0]]
  $region65: #{double_conv_forward.1} parent=0
    _
  %s11 = ssub.s32 1, %s9
  %s12 = scalar_select 0, %s11, %s9
  loop: start=0, step=1, limit=4
  $region2: #{double_conv_forward.1} parent=0 // loop_pre_header
    _
  $region3: #{double_conv_forward.1} parent=0 // loop_header
    %s14 = sphi 0, %s18
    %p15 = scmp.ge.s32.totalorder %s14, 4
    %s24 = sphi 0, %s26
    %s27 = sphi 0, %s24
    %s28 = sphi 0, %s27
    %s44 = sphi 0, %s28
    %s48 = sphi 0, %s48
    %s50 = sphi 0, %s48
    %s51 = sphi 0, %s50
    %s65 = sphi 0, %s51
    %s69 = sphi 0, %s69
    %s71 = sphi 0, %s69
    %s72 = sphi 0, %s71
    %s86 = sphi 0, %s72
    %s90 = sphi 0, %s90
    %s92 = sphi 0, %s90
    %s93 = sphi 0, %s92
    %s107 = sphi 0, %s93
    %s111 = sphi 0, %s111
    %s113 = sphi 0, %s111
    %s114 = sphi 0, %s113
    %s128 = sphi 0, %s114
    %s132 = sphi 0, %s132
    %s134 = sphi 0, %s132
    %s135 = sphi 0, %s134
    %s149 = sphi 0, %s135
    %s153 = sphi 0, %s153
    %s155 = sphi 0, %s153
    %s156 = sphi 0, %s155
    %s170 = sphi 0, %s156
    %s174 = sphi 0, %s174
    %s176 = sphi 0, %s174
    %s177 = sphi 0, %s176
    %s191 = sphi 0, %s177
    %s197 = sphi 0, %s199
    %s200 = sphi 0, %s197
    %s201 = sphi 0, %s200
    %s217 = sphi 0, %s201
  $region4: #{double_conv_forward.1} parent=0 // loop_header_branch
    %17 = sbr.rel (%p15) target = $region8
  $region5: #{double_conv_forward.1} parent=0 // loop_body
    %s19 = ssub.s32 %s14, 1
    %s20 = ssub.s32 %s14, 2
    %s21 = sadd.s32 %s14, 1
    %s22 = ssub.s32 %s14, %s21
    %p23 = scmp.eq.s32.totalorder %s22, 0
    %s25 = sadd.s32 %s24, 1
    %s26 = scalar_select %p23, %s24, %s25
    %p29 = pneg %p23
    %p30 = scmp.eq.s32.totalorder %s14, 1
    %p31 = por %p29, %p30
    %p32 = scmp.ne.s32.totalorder %s24, %s27
    %p33 = scmp.eq.s32.totalorder %s14, 0
    %p34 = por %p32, %p33
    %p35 = scmp.ne.s32.totalorder %s24, %s27
    %p36 = scmp.eq.s32.totalorder %s19, 1
    %p37 = por %p35, %p36
    %p38 = scmp.ne.s32.totalorder %s27, %s28
    %p39 = scmp.eq.s32.totalorder %s19, 0
    %p40 = por %p38, %p39
    %p41 = scmp.ne.s32.totalorder %s27, %s28
    %p42 = scmp.eq.s32.totalorder %s20, 1
    %p43 = por %p41, %p42
    %p45 = scmp.ne.s32.totalorder %s28, %s44
    %p46 = scmp.eq.s32.totalorder %s20, 0
    %p47 = por %p45, %p46
    %s49 = sadd.s32 %s48, 1
    %p52 = scmp.eq.s32.totalorder %s14, 1
    %p53 = scmp.ne.s32.totalorder %s48, %s50
    %p54 = scmp.eq.s32.totalorder %s14, 0
    %p55 = por %p53, %p54
    %p56 = scmp.ne.s32.totalorder %s48, %s50
    %p57 = scmp.eq.s32.totalorder %s19, 1
    %p58 = por %p56, %p57
    %p59 = scmp.ne.s32.totalorder %s50, %s51
    %p60 = scmp.eq.s32.totalorder %s19, 0
    %p61 = por %p59, %p60
    %p62 = scmp.ne.s32.totalorder %s50, %s51
    %p63 = scmp.eq.s32.totalorder %s20, 1
    %p64 = por %p62, %p63
    %p66 = scmp.ne.s32.totalorder %s51, %s65
    %p67 = scmp.eq.s32.totalorder %s20, 0
    %p68 = por %p66, %p67
    %s70 = sadd.s32 %s69, 1
    %p73 = scmp.eq.s32.totalorder %s14, 1
    %p74 = scmp.ne.s32.totalorder %s69, %s71
    %p75 = scmp.eq.s32.totalorder %s14, 0
    %p76 = por %p74, %p75
    %p77 = scmp.ne.s32.totalorder %s69, %s71
    %p78 = scmp.eq.s32.totalorder %s19, 1
    %p79 = por %p77, %p78
    %p80 = scmp.ne.s32.totalorder %s71, %s72
    %p81 = scmp.eq.s32.totalorder %s19, 0
    %p82 = por %p80, %p81
    %p83 = scmp.ne.s32.totalorder %s71, %s72
    %p84 = scmp.eq.s32.totalorder %s20, 1
    %p85 = por %p83, %p84
    %p87 = scmp.ne.s32.totalorder %s72, %s86
    %p88 = scmp.eq.s32.totalorder %s20, 0
    %p89 = por %p87, %p88
    %s91 = sadd.s32 %s90, 1
    %p94 = scmp.eq.s32.totalorder %s14, 1
    %p95 = scmp.ne.s32.totalorder %s90, %s92
    %p96 = scmp.eq.s32.totalorder %s14, 0
    %p97 = por %p95, %p96
    %p98 = scmp.ne.s32.totalorder %s90, %s92
    %p99 = scmp.eq.s32.totalorder %s19, 1
    %p100 = por %p98, %p99
    %p101 = scmp.ne.s32.totalorder %s92, %s93
    %p102 = scmp.eq.s32.totalorder %s19, 0
    %p103 = por %p101, %p102
    %p104 = scmp.ne.s32.totalorder %s92, %s93
    %p105 = scmp.eq.s32.totalorder %s20, 1
    %p106 = por %p104, %p105
    %p108 = scmp.ne.s32.totalorder %s93, %s107
    %p109 = scmp.eq.s32.totalorder %s20, 0
    %p110 = por %p108, %p109
    %s112 = sadd.s32 %s111, 1
    %p115 = scmp.eq.s32.totalorder %s14, 1
    %p116 = scmp.ne.s32.totalorder %s111, %s113
    %p117 = scmp.eq.s32.totalorder %s14, 0
    %p118 = por %p116, %p117
    %p119 = scmp.ne.s32.totalorder %s111, %s113
    %p120 = scmp.eq.s32.totalorder %s19, 1
    %p121 = por %p119, %p120
    %p122 = scmp.ne.s32.totalorder %s113, %s114
    %p123 = scmp.eq.s32.totalorder %s19, 0
    %p124 = por %p122, %p123
    %p125 = scmp.ne.s32.totalorder %s113, %s114
    %p126 = scmp.eq.s32.totalorder %s20, 1
    %p127 = por %p125, %p126
    %p129 = scmp.ne.s32.totalorder %s114, %s128
    %p130 = scmp.eq.s32.totalorder %s20, 0
    %p131 = por %p129, %p130
    %s133 = sadd.s32 %s132, 1
    %p136 = scmp.eq.s32.totalorder %s14, 1
    %p137 = scmp.ne.s32.totalorder %s132, %s134
    %p138 = scmp.eq.s32.totalorder %s14, 0
    %p139 = por %p137, %p138
    %p140 = scmp.ne.s32.totalorder %s132, %s134
    %p141 = scmp.eq.s32.totalorder %s19, 1
    %p142 = por %p140, %p141
    %p143 = scmp.ne.s32.totalorder %s134, %s135
    %p144 = scmp.eq.s32.totalorder %s19, 0
    %p145 = por %p143, %p144
    %p146 = scmp.ne.s32.totalorder %s134, %s135
    %p147 = scmp.eq.s32.totalorder %s20, 1
    %p148 = por %p146, %p147
    %p150 = scmp.ne.s32.totalorder %s135, %s149
    %p151 = scmp.eq.s32.totalorder %s20, 0
    %p152 = por %p150, %p151
    %s154 = sadd.s32 %s153, 1
    %p157 = scmp.eq.s32.totalorder %s14, 1
    %p158 = scmp.ne.s32.totalorder %s153, %s155
    %p159 = scmp.eq.s32.totalorder %s14, 0
    %p160 = por %p158, %p159
    %p161 = scmp.ne.s32.totalorder %s153, %s155
    %p162 = scmp.eq.s32.totalorder %s19, 1
    %p163 = por %p161, %p162
    %p164 = scmp.ne.s32.totalorder %s155, %s156
    %p165 = scmp.eq.s32.totalorder %s19, 0
    %p166 = por %p164, %p165
    %p167 = scmp.ne.s32.totalorder %s155, %s156
    %p168 = scmp.eq.s32.totalorder %s20, 1
    %p169 = por %p167, %p168
    %p171 = scmp.ne.s32.totalorder %s156, %s170
    %p172 = scmp.eq.s32.totalorder %s20, 0
    %p173 = por %p171, %p172
    %s175 = sadd.s32 %s174, 1
    %p178 = scmp.eq.s32.totalorder %s14, 1
    %p179 = scmp.ne.s32.totalorder %s174, %s176
    %p180 = scmp.eq.s32.totalorder %s14, 0
    %p181 = por %p179, %p180
    %p182 = scmp.ne.s32.totalorder %s174, %s176
    %p183 = scmp.eq.s32.totalorder %s19, 1
    %p184 = por %p182, %p183
    %p185 = scmp.ne.s32.totalorder %s176, %s177
    %p186 = scmp.eq.s32.totalorder %s19, 0
    %p187 = por %p185, %p186
    %p188 = scmp.ne.s32.totalorder %s176, %s177
    %p189 = scmp.eq.s32.totalorder %s20, 1
    %p190 = por %p188, %p189
    %p192 = scmp.ne.s32.totalorder %s177, %s191
    %p193 = scmp.eq.s32.totalorder %s20, 0
    %p194 = por %p192, %p193
    %s195 = ssub.s32 %s14, %s21
    %p196 = scmp.eq.s32.totalorder %s195, 0
    %s198 = sadd.s32 %s197, 1
    %s199 = scalar_select %p196, %s197, %s198
    %p202 = pneg %p196
    %p203 = scmp.eq.s32.totalorder %s14, 1
    %p204 = por %p202, %p203
    %p205 = scmp.ne.s32.totalorder %s197, %s200
    %p206 = scmp.eq.s32.totalorder %s14, 0
    %p207 = por %p205, %p206
    %p208 = scmp.ne.s32.totalorder %s197, %s200
    %p209 = scmp.eq.s32.totalorder %s19, 1
    %p210 = por %p208, %p209
    %p211 = scmp.ne.s32.totalorder %s200, %s201
    %p212 = scmp.eq.s32.totalorder %s19, 0
    %p213 = por %p211, %p212
    %p214 = scmp.ne.s32.totalorder %s200, %s201
    %p215 = scmp.eq.s32.totalorder %s20, 1
    %p216 = por %p214, %p215
    %p218 = scmp.ne.s32.totalorder %s201, %s217
    %p219 = scmp.eq.s32.totalorder %s20, 0
    %p220 = por %p218, %p219
    %p221 = scmp.le.s32.totalorder 1, %s14
    %p222 = scmp.lt.s32.totalorder %s14, 3
    %p223 = pnand %p221, %p222
    %p224 = pneg %p223
    // Predicated region
    $region9: #{double_conv_forward.1} parent=5 // pred_check
      _
    $region10: #{double_conv_forward.1} parent=5 // pred_check_branch
      %226 = sbr.rel (%p223) target = $region12
    $region11: #{double_conv_forward.1} parent=5 // pred_region
      %s227 = ssub.s32 %s14, 1
      // Predicated region
      $region13: #{double_conv_forward.1} parent=11 // pred_check
        %p228 = pneg %p61
      $region14: #{double_conv_forward.1} parent=11 // pred_check_branch
        %230 = sbr.rel (%p228) target = $region16
      $region15: #{double_conv_forward.1} parent=11 // pred_region
        _
      $region16: #{double_conv_forward.1} parent=11 // pred_fallthru
        _
      // Predicated region
      $region17: #{double_conv_forward.1} parent=11 // pred_check
        %p231 = pneg %p82
      $region18: #{double_conv_forward.1} parent=11 // pred_check_branch
        %233 = sbr.rel (%p231) target = $region20
      $region19: #{double_conv_forward.1} parent=11 // pred_region
        _
      $region20: #{double_conv_forward.1} parent=11 // pred_fallthru
        _
      // Predicated region
      $region21: #{double_conv_forward.1} parent=11 // pred_check
        %p234 = pneg %p103
      $region22: #{double_conv_forward.1} parent=11 // pred_check_branch
        %236 = sbr.rel (%p234) target = $region24
      $region23: #{double_conv_forward.1} parent=11 // pred_region
        _
      $region24: #{double_conv_forward.1} parent=11 // pred_fallthru
        _
      // Predicated region
      $region25: #{double_conv_forward.1} parent=11 // pred_check
        %p237 = pneg %p124
      $region26: #{double_conv_forward.1} parent=11 // pred_check_branch
        %239 = sbr.rel (%p237) target = $region28
      $region27: #{double_conv_forward.1} parent=11 // pred_region
        _
      $region28: #{double_conv_forward.1} parent=11 // pred_fallthru
        _
      // Predicated region
      $region29: #{double_conv_forward.1} parent=11 // pred_check
        %p240 = pneg %p145
      $region30: #{double_conv_forward.1} parent=11 // pred_check_branch
        %242 = sbr.rel (%p240) target = $region32
      $region31: #{double_conv_forward.1} parent=11 // pred_region
        _
      $region32: #{double_conv_forward.1} parent=11 // pred_fallthru
        _
      // Predicated region
      $region33: #{double_conv_forward.1} parent=11 // pred_check
        %p243 = pneg %p166
      $region34: #{double_conv_forward.1} parent=11 // pred_check_branch
        %245 = sbr.rel (%p243) target = $region36
      $region35: #{double_conv_forward.1} parent=11 // pred_region
        _
      $region36: #{double_conv_forward.1} parent=11 // pred_fallthru
        _
      // Predicated region
      $region37: #{double_conv_forward.1} parent=11 // pred_check
        %p246 = pneg %p187
      $region38: #{double_conv_forward.1} parent=11 // pred_check_branch
        %248 = sbr.rel (%p246) target = $region40
      $region39: #{double_conv_forward.1} parent=11 // pred_region
        _
      $region40: #{double_conv_forward.1} parent=11 // pred_fallthru
        _
    $region12: #{double_conv_forward.1} parent=5 // pred_fallthru
      _
    %p249 = scmp.lt.s32.totalorder %s14, 2
    // Predicated region
    $region41: #{double_conv_forward.1} parent=5 // pred_check
      %p250 = pneg %p249
    $region42: #{double_conv_forward.1} parent=5 // pred_check_branch
      %252 = sbr.rel (%p250) target = $region44
    $region43: #{double_conv_forward.1} parent=5 // pred_region
      // Predicated region
      $region45: #{double_conv_forward.1} parent=43 // pred_check
        %p253 = pneg %p34
      $region46: #{double_conv_forward.1} parent=43 // pred_check_branch
        %255 = sbr.rel (%p253) target = $region48
      $region47: #{double_conv_forward.1} parent=43 // pred_region
        %p256 = scmp.lt.s32.totalorder %s14, 1
        %s257 = scalar_select %p256, %s14, 1
        %s258 = smul.addr %s257, 4
        %s259 = smul.addr %s258, 8
        %s260 = scalar_lea.vmem %s0, %s259
      $region48: #{double_conv_forward.1} parent=43 // pred_fallthru
        _
    $region44: #{double_conv_forward.1} parent=5 // pred_fallthru
      _
    %p261 = scmp.le.s32.totalorder 1, %s14
    %p262 = scmp.lt.s32.totalorder %s14, 3
    %p263 = pnand %p261, %p262
    %p264 = pneg %p263
    // Predicated region
    $region49: #{double_conv_forward.1} parent=5 // pred_check
      _
    $region50: #{double_conv_forward.1} parent=5 // pred_check_branch
      %266 = sbr.rel (%p263) target = $region52
    $region51: #{double_conv_forward.1} parent=5 // pred_region
      %s267 = ssub.s32 %s14, 1
      %p268 = scmp.lt.s32.totalorder %s19, 1
      %s269 = scalar_select %p268, %s19, 1
      %s270 = smul.addr %s269, 4
      %s271 = smul.addr %s270, 8
      %s272 = scalar_lea.vmem %s0, %s271
      %p273 = pneg %p40
      %p274 = pneg %p37
      %p275 = pneg %p61
      %p276 = pneg %p58
      %p277 = pneg %p82
      %p278 = pneg %p79
      %p279 = pneg %p103
      %p280 = pneg %p100
      %p281 = pneg %p124
      %p282 = pneg %p121
      %p283 = pneg %p145
      %p284 = pneg %p142
      %p285 = pneg %p166
      %p286 = pneg %p163
      %p287 = pneg %p187
      %p288 = pneg %p184
      %p289 = pneg %p213
      %p290 = pneg %p210
      %p291 = scmp.lt.s32.totalorder %s19, 1
      %s292 = scalar_select %p291, %s19, 1
      %s293 = smul.addr %s292, 4
      %s294 = smul.addr %s293, 8
      %s295 = scalar_lea.vmem %s8, %s294
      %p296 = scmp.lt.s32.totalorder %s19, 1
      %s297 = scalar_select %p296, %s19, 1
      %s298 = smul.addr %s297, 4
      %s299 = smul.addr %s298, 8
      %s300 = scalar_lea.vmem %s0, %s299
      %p301 = scmp.lt.s32.totalorder %s19, 1
      %s302 = scalar_select %p301, %s19, 1
      %s303 = smul.addr %s302, 4
      %s304 = smul.addr %s303, 8
      %s305 = scalar_lea.vmem %s8, %s304
      %v306 = vld [vmem:[%s300] sm:$0xff]
      %v307 = vld [vmem:[%s300 + $0x8] sm:$0xff]
      %v308 = vld [vmem:[%s300 + $0x10] sm:$0xf]
      %v309 = vld [vmem:[%s300 + $0x18] sm:$0xf]
      %v310 = vld [vmem:[%s1] sm:$0xff]
      %v311 = vld [vmem:[%s1 + $0x8] sm:$0xff]
      %v312 = vld [vmem:[%s1 + $0x10] sm:$0xff]
      %v313 = vld [vmem:[%s1 + $0x18] sm:$0xff]
      %v314 = vld [vmem:[%s1 + $0x20] sm:$0xff]
      %v315 = vld [vmem:[%s1 + $0x28] sm:$0xff]
      %vm316 = vcmask 97280
      %v318 = vsel %vm316, %v310, 0
      %v321 = vsel %vm316, %v311, 0
      %v324 = vsel %vm316, %v312, 0
      %v327 = vsel %vm316, %v313, 0
      %v330 = vsel %vm316, %v314, 0
      %v333 = vsel %vm316, %v315, 0
      %vm335 = vcmask 1043456
      %v337 = vsel %vm335, %v308, 0
      %v340 = vsel %vm335, %v309, 0
      %342 = vmatpush.msra.mxu0 0.0
      %343 = vmatpush.msra.mxu0 0.0
      %344 = vmatpush.msra.mxu0 0.0
      %345 = vmatpush.msra.mxu0 0.0
      %346 = vmatpush.msra.mxu0 0.0
      %347 = vmatpush.msra.mxu0 0.0
      %348 = vmatpush.msra.mxu0 0.0
      %349 = vmatpush.msra.mxu0 0.0
      %350 = vmatpush.msra.mxu0 0.0
      %351 = vmatpush.msra.mxu0 0.0
      %352 = vmatpush.msra.mxu0 0.0
      %353 = vmatpush.msra.mxu0 0.0
      %354 = vmatpush.msra.mxu0 0.0
      %355 = vmatpush.msra.mxu0 0.0
      %356 = vmatpush.msra.mxu0 %v337
      %357 = vmatpush.msra.mxu0 %v306
      %358 = vmatmul.f32.gmra.mxu0 %v318
      %v359 = vpop.f32.mrf.mxu0
      %v360 = vadd.f32 0.0, %v359
      %361 = vmatmul.f32.gmra.mxu0 %v321
      %v362 = vpop.f32.mrf.mxu0
      %v363 = vadd.f32 0.0, %v362
      %364 = vmatmul.f32.gmra.mxu0 %v324
      %v365 = vpop.f32.mrf.mxu0
      %v366 = vadd.f32 0.0, %v365
      %367 = vmatmul.f32.gmra.mxu0 %v327
      %v368 = vpop.f32.mrf.mxu0
      %v369 = vadd.f32 0.0, %v368
      %370 = vmatmul.f32.gmra.mxu0 %v330
      %v371 = vpop.f32.mrf.mxu0
      %v372 = vadd.f32 0.0, %v371
      %373 = vmatmul.f32.gmra.mxu0 %v333
      %v374 = vpop.f32.mrf.mxu0
      %v375 = vadd.f32 0.0, %v374
      %376 = vdwg.mxu0
      %377 = vmatpush.msra.mxu0 0.0
      %378 = vmatpush.msra.mxu0 0.0
      %379 = vmatpush.msra.mxu0 0.0
      %380 = vmatpush.msra.mxu0 0.0
      %381 = vmatpush.msra.mxu0 0.0
      %382 = vmatpush.msra.mxu0 0.0
      %383 = vmatpush.msra.mxu0 0.0
      %384 = vmatpush.msra.mxu0 0.0
      %385 = vmatpush.msra.mxu0 0.0
      %386 = vmatpush.msra.mxu0 0.0
      %387 = vmatpush.msra.mxu0 0.0
      %388 = vmatpush.msra.mxu0 0.0
      %389 = vmatpush.msra.mxu0 0.0
      %390 = vmatpush.msra.mxu0 0.0
      %391 = vmatpush.msra.mxu0 %v340
      %392 = vmatpush.msra.mxu0 %v307
      %393 = vmatmul.f32.gmra.mxu0 %v318
      %v394 = vpop.f32.mrf.mxu0
      %v395 = vadd.f32 0.0, %v394
      %396 = vmatmul.f32.gmra.mxu0 %v321
      %v397 = vpop.f32.mrf.mxu0
      %v398 = vadd.f32 0.0, %v397
      %399 = vmatmul.f32.gmra.mxu0 %v324
      %v400 = vpop.f32.mrf.mxu0
      %v401 = vadd.f32 0.0, %v400
      %402 = vmatmul.f32.gmra.mxu0 %v327
      %v403 = vpop.f32.mrf.mxu0
      %v404 = vadd.f32 0.0, %v403
      %405 = vmatmul.f32.gmra.mxu0 %v330
      %v406 = vpop.f32.mrf.mxu0
      %v407 = vadd.f32 0.0, %v406
      %408 = vmatmul.f32.gmra.mxu0 %v333
      %v409 = vpop.f32.mrf.mxu0
      %v410 = vadd.f32 0.0, %v409
      %411 = vdwg.mxu0
      %v412 = vadd.f32 %v360, %v395
      %413 = vadd.xlane.f32.xlu0 %v412
      %v414 = vpop.xlane.xlu0 %413
      %v415 = vadd.f32 %v363, %v398
      %416 = vadd.xlane.f32.xlu0 %v415
      %v417 = vpop.xlane.xlu0 %416
      %v418 = vadd.f32 %v366, %v401
      %419 = vadd.xlane.f32.xlu0 %v418
      %v420 = vpop.xlane.xlu0 %419
      %v421 = vadd.f32 %v369, %v404
      %422 = vadd.xlane.f32.xlu0 %v421
      %v423 = vpop.xlane.xlu0 %422
      %v424 = vadd.f32 %v372, %v407
      %425 = vadd.xlane.f32.xlu0 %v424
      %v426 = vpop.xlane.xlu0 %425
      %v427 = vadd.f32 %v375, %v410
      %428 = vadd.xlane.f32.xlu0 %v427
      %v429 = vpop.xlane.xlu0 %428
      %v430 = vrcp.pop 256.0
      %v431 = vmul.f32 256.0, %v430
      %v432 = vsub.f32 1.0, %v431
      %v433 = vmul.f32 %v430, %v432
      %v434 = vadd.f32 %v430, %v433
      %vm435 = vweird.f32 %v430
      %v436 = vsel %vm435, %v430, %v434
      %v437 = vmul.f32 %v414, %v436
      %v438 = vmul.f32 %v417, %v436
      %v439 = vmul.f32 %v420, %v436
      %v440 = vmul.f32 %v423, %v436
      %v441 = vmul.f32 %v426, %v436
      %v442 = vmul.f32 %v429, %v436
      %v443 = vmul.f32 %v360, %v360
      %v444 = vmul.f32 %v395, %v395
      %v445 = vmul.f32 %v363, %v363
      %v446 = vmul.f32 %v398, %v398
      %v447 = vmul.f32 %v366, %v366
      %v448 = vmul.f32 %v401, %v401
      %v449 = vmul.f32 %v369, %v369
      %v450 = vmul.f32 %v404, %v404
      %v451 = vmul.f32 %v372, %v372
      %v452 = vmul.f32 %v407, %v407
      %v453 = vmul.f32 %v375, %v375
      %v454 = vmul.f32 %v410, %v410
      %v455 = vadd.f32 %v443, %v444
      %456 = vadd.xlane.f32.xlu0 %v455
      %v457 = vpop.xlane.xlu0 %456
      %v458 = vadd.f32 %v445, %v446
      %459 = vadd.xlane.f32.xlu0 %v458
      %v460 = vpop.xlane.xlu0 %459
      %v461 = vadd.f32 %v447, %v448
      %462 = vadd.xlane.f32.xlu0 %v461
      %v463 = vpop.xlane.xlu0 %462
      %v464 = vadd.f32 %v449, %v450
      %465 = vadd.xlane.f32.xlu0 %v464
      %v466 = vpop.xlane.xlu0 %465
      %v467 = vadd.f32 %v451, %v452
      %468 = vadd.xlane.f32.xlu0 %v467
      %v469 = vpop.xlane.xlu0 %468
      %v470 = vadd.f32 %v453, %v454
      %471 = vadd.xlane.f32.xlu0 %v470
      %v472 = vpop.xlane.xlu0 %471
      %v473 = vmul.f32 %v457, %v436
      %v474 = vmul.f32 %v460, %v436
      %v475 = vmul.f32 %v463, %v436
      %v476 = vmul.f32 %v466, %v436
      %v477 = vmul.f32 %v469, %v436
      %v478 = vmul.f32 %v472, %v436
      %v479 = vmul.f32 %v437, %v437
      %v480 = vmul.f32 %v438, %v438
      %v481 = vmul.f32 %v439, %v439
      %v482 = vmul.f32 %v440, %v440
      %v483 = vmul.f32 %v441, %v441
      %v484 = vmul.f32 %v442, %v442
      %v485 = vsub.f32 %v473, %v479
      %v486 = vsub.f32 %v474, %v480
      %v487 = vsub.f32 %v475, %v481
      %v488 = vsub.f32 %v476, %v482
      %v489 = vsub.f32 %v477, %v483
      %v490 = vsub.f32 %v478, %v484
      %v491 = vmax.f32 %v485, 0.0
      %v492 = vmax.f32 %v486, 0.0
      %v493 = vmax.f32 %v487, 0.0
      %v494 = vmax.f32 %v488, 0.0
      %v495 = vmax.f32 %v489, 0.0
      %v496 = vmax.f32 %v490, 0.0
      %v497 = vsub.f32 %v360, %v437
      %v498 = vsub.f32 %v395, %v437
      %v499 = vsub.f32 %v363, %v438
      %v500 = vsub.f32 %v398, %v438
      %v501 = vsub.f32 %v366, %v439
      %v502 = vsub.f32 %v401, %v439
      %v503 = vsub.f32 %v369, %v440
      %v504 = vsub.f32 %v404, %v440
      %v505 = vsub.f32 %v372, %v441
      %v506 = vsub.f32 %v407, %v441
      %v507 = vsub.f32 %v375, %v442
      %v508 = vsub.f32 %v410, %v442
      %v509 = vadd.f32 %v491, 1e-05
      %v510 = vadd.f32 %v492, 1e-05
      %v511 = vadd.f32 %v493, 1e-05
      %v512 = vadd.f32 %v494, 1e-05
      %v513 = vadd.f32 %v495, 1e-05
      %v514 = vadd.f32 %v496, 1e-05
      %v515 = vrsqrt.pop %v509
      %v516 = vmul.f32 %v515, %v509
      %v517 = vmul.f32 %v516, %v515
      %v518 = vmul.f32 0.5, %v517
      %v519 = vsub.f32 1.5, %v518
      %v520 = vmul.f32 %v515, %v519
      %vm521 = vweird.f32 %v509
      %vm522 = vweird.f32 %v515
      %vm523 = vmor %vm521, %vm522
      %v524 = vsel %vm523, %v515, %v520
      %v525 = vrsqrt.pop %v510
      %v526 = vmul.f32 %v525, %v510
      %v527 = vmul.f32 %v526, %v525
      %v528 = vmul.f32 0.5, %v527
      %v529 = vsub.f32 1.5, %v528
      %v530 = vmul.f32 %v525, %v529
      %vm531 = vweird.f32 %v510
      %vm532 = vweird.f32 %v525
      %vm533 = vmor %vm531, %vm532
      %v534 = vsel %vm533, %v525, %v530
      %v535 = vrsqrt.pop %v511
      %v536 = vmul.f32 %v535, %v511
      %v537 = vmul.f32 %v536, %v535
      %v538 = vmul.f32 0.5, %v537
      %v539 = vsub.f32 1.5, %v538
      %v540 = vmul.f32 %v535, %v539
      %vm541 = vweird.f32 %v511
      %vm542 = vweird.f32 %v535
      %vm543 = vmor %vm541, %vm542
      %v544 = vsel %vm543, %v535, %v540
      %v545 = vrsqrt.pop %v512
      %v546 = vmul.f32 %v545, %v512
      %v547 = vmul.f32 %v546, %v545
      %v548 = vmul.f32 0.5, %v547
      %v549 = vsub.f32 1.5, %v548
      %v550 = vmul.f32 %v545, %v549
      %vm551 = vweird.f32 %v512
      %vm552 = vweird.f32 %v545
      %vm553 = vmor %vm551, %vm552
      %v554 = vsel %vm553, %v545, %v550
      %v555 = vrsqrt.pop %v513
      %v556 = vmul.f32 %v555, %v513
      %v557 = vmul.f32 %v556, %v555
      %v558 = vmul.f32 0.5, %v557
      %v559 = vsub.f32 1.5, %v558
      %v560 = vmul.f32 %v555, %v559
      %vm561 = vweird.f32 %v513
      %vm562 = vweird.f32 %v555
      %vm563 = vmor %vm561, %vm562
      %v564 = vsel %vm563, %v555, %v560
      %v565 = vrsqrt.pop %v514
      %v566 = vmul.f32 %v565, %v514
      %v567 = vmul.f32 %v566, %v565
      %v568 = vmul.f32 0.5, %v567
      %v569 = vsub.f32 1.5, %v568
      %v570 = vmul.f32 %v565, %v569
      %vm571 = vweird.f32 %v514
      %vm572 = vweird.f32 %v565
      %vm573 = vmor %vm571, %vm572
      %v574 = vsel %vm573, %v565, %v570
      %v575 = vmul.f32 %v497, %v524
      %v576 = vmul.f32 %v498, %v524
      %v577 = vmul.f32 %v499, %v534
      %v578 = vmul.f32 %v500, %v534
      %v579 = vmul.f32 %v501, %v544
      %v580 = vmul.f32 %v502, %v544
      %v581 = vmul.f32 %v503, %v554
      %v582 = vmul.f32 %v504, %v554
      %v583 = vmul.f32 %v505, %v564
      %v584 = vmul.f32 %v506, %v564
      %v585 = vmul.f32 %v507, %v574
      %v586 = vmul.f32 %v508, %v574
      %v587 = vmax.f32 %v575, 0.0
      %v588 = vmax.f32 %v576, 0.0
      %v589 = vmax.f32 %v577, 0.0
      %v590 = vmax.f32 %v578, 0.0
      %v591 = vmax.f32 %v579, 0.0
      %v592 = vmax.f32 %v580, 0.0
      %v593 = vmax.f32 %v581, 0.0
      %v594 = vmax.f32 %v582, 0.0
      %v595 = vmax.f32 %v583, 0.0
      %v596 = vmax.f32 %v584, 0.0
      %v597 = vmax.f32 %v585, 0.0
      %v598 = vmax.f32 %v586, 0.0
      %v599 = vlaneseq
      %v600 = vand.u32 %v599, 127
      %v601 = vadd.s32 %v600, 128
      %vm602 = vcmp.lt.s32.totalorder %v600, 0
      %v603 = vsub.s32 0, %v600
      %v604 = vsel %vm602, %v603, %v600
      %v605 = vshrl.u32 %v604, 4
      %v606 = vand.u32 %v604, 15
      %v607 = vsub.s32 0, %v606
      %v608 = vsel %vm602, %v607, %v606
      %vm609 = vcmp.lt.s32.totalorder %v601, 0
      %v610 = vsub.s32 0, %v601
      %v611 = vsel %vm609, %v610, %v601
      %v612 = vshrl.u32 %v611, 4
      %v613 = vand.u32 %v611, 15
      %v614 = vsub.s32 0, %v613
      %v615 = vsel %vm609, %v614, %v613
      %vm616 = vcmp.ne.s32.totalorder %v608, 0
      %vm617 = vcmp.ne.s32.totalorder %v615, 0
      %vm618 = vcmp.lt.s32.totalorder %v608, 0
      %vm619 = vcmp.lt.s32.totalorder %v615, 0
      %vm620 = vmand %vm618, %vm616
      %vm621 = vmand %vm619, %vm617
      %v622 = vadd.s32 %v608, 16
      %v623 = vadd.s32 %v615, 16
      %v624 = vsel %vm620, %v622, %v608
      %v625 = vsel %vm621, %v623, %v615
      %vm626 = vcmp.eq.s32.totalorder %v624, 0
      %vm627 = vcmp.eq.s32.totalorder %v625, 0
      %vm628 = vcmp.eq.s32.totalorder %v624, 15
      %vm629 = vcmp.eq.s32.totalorder %v625, 15
      %vm630 = vcmp.lt.s32.totalorder %v600, 16
      %vm631 = vcmp.lt.s32.totalorder %v601, 16
      %vm632 = vcmp.ge.s32.totalorder %v600, 240
      %vm633 = vcmp.ge.s32.totalorder %v601, 240
      %v634 = vlaneseq
      %v635 = vshrl.u32 %v634, 7
      %vm636 = vcmp.eq.s32.totalorder %v635, 0
      %v637 = vsel %vm636, 1.0, 0.0
      %v638 = vadd.f32 %v589, %v587
      %v639 = vadd.f32 %v590, %v588
      %v640 = vld [vmem:[%s2] sm:$0xff]
      %641 = vrot.lane.b32.xlu0 %v638, 1
      %v642 = vpop.permute.xlu0 %641
      %643 = vrot.lane.b32.xlu0 %v639, 1
      %v644 = vpop.permute.xlu0 %643
      %vm645 = vcmp.lt.s32.totalorder %v600, 1
      %v646 = vsel %vm645, %v642, %v644
      %v647 = vsel %vm645, %v644, %v642
      %v648 = vsel %vm626, 0.0, %v647
      %v649 = vsel %vm627, 0.0, %v646
      %650 = vrot.lane.b32.xlu0 %v638, 127
      %v651 = vpop.permute.xlu0 %650
      %652 = vrot.lane.b32.xlu0 %v639, 127
      %v653 = vpop.permute.xlu0 %652
      %vm654 = vcmp.lt.s32.totalorder %v600, 127
      %v655 = vsel %vm654, %v651, %v653
      %v656 = vsel %vm654, %v653, %v651
      %v657 = vsel %vm628, 0.0, %v655
      %v658 = vsel %vm629, 0.0, %v656
      %vm659 = vcmask 195584
      %v661 = vsel %vm659, %v640, 0
      %663 = vmatpush.msra.mxu0 0.0
      %664 = vmatpush.msra.mxu0 0.0
      %665 = vmatpush.msra.mxu0 0.0
      %666 = vmatpush.msra.mxu0 0.0
      %667 = vmatpush.msra.mxu0 0.0
      %668 = vmatpush.msra.mxu0 0.0
      %669 = vmatpush.msra.mxu0 0.0
      %670 = vmatpush.msra.mxu0 0.0
      %671 = vmatpush.msra.mxu0 0.0
      %672 = vmatpush.msra.mxu0 0.0
      %673 = vmatpush.msra.mxu0 0.0
      %674 = vmatpush.msra.mxu0 0.0
      %675 = vmatpush.msra.mxu0 0.0
      %676 = vmatpush.msra.mxu0 %v657
      %677 = vmatpush.msra.mxu0 %v638
      %678 = vmatpush.msra.mxu0 %v648
      %679 = vmatmul.f32.gmra.mxu0 %v661
      %v680 = vpop.f32.mrf.mxu0
      %v681 = vadd.f32 0.0, %v680
      %682 = vdwg.mxu0
      %683 = vmatpush.msra.mxu0 0.0
      %684 = vmatpush.msra.mxu0 0.0
      %685 = vmatpush.msra.mxu0 0.0
      %686 = vmatpush.msra.mxu0 0.0
      %687 = vmatpush.msra.mxu0 0.0
      %688 = vmatpush.msra.mxu0 0.0
      %689 = vmatpush.msra.mxu0 0.0
      %690 = vmatpush.msra.mxu0 0.0
      %691 = vmatpush.msra.mxu0 0.0
      %692 = vmatpush.msra.mxu0 0.0
      %693 = vmatpush.msra.mxu0 0.0
      %694 = vmatpush.msra.mxu0 0.0
      %695 = vmatpush.msra.mxu0 0.0
      %696 = vmatpush.msra.mxu0 %v658
      %697 = vmatpush.msra.mxu0 %v639
      %698 = vmatpush.msra.mxu0 %v649
      %699 = vmatmul.f32.gmra.mxu0 %v661
      %v700 = vpop.f32.mrf.mxu0
      %v701 = vadd.f32 0.0, %v700
      %702 = vdwg.mxu0
      %v703 = vadd.f32 %v681, %v701
      %704 = vadd.xlane.f32.xlu0 %v703
      %v705 = vpop.xlane.xlu0 %704
      %v706 = vmul.f32 %v705, %v436
      %v707 = vmul.f32 %v681, %v681
      %v708 = vmul.f32 %v701, %v701
      %v709 = vadd.f32 %v707, %v708
      %710 = vadd.xlane.f32.xlu0 %v709
      %v711 = vpop.xlane.xlu0 %710
      %v712 = vmul.f32 %v711, %v436
      %v713 = vmul.f32 %v706, %v706
      %v714 = vsub.f32 %v712, %v713
      %v715 = vmax.f32 %v714, 0.0
      %v716 = vsub.f32 %v681, %v706
      %v717 = vsub.f32 %v701, %v706
      %v718 = vadd.f32 %v715, 1e-05
      %v719 = vrsqrt.pop %v718
      %v720 = vmul.f32 %v719, %v718
      %v721 = vmul.f32 %v720, %v719
      %v722 = vmul.f32 0.5, %v721
      %v723 = vsub.f32 1.5, %v722
      %v724 = vmul.f32 %v719, %v723
      %vm725 = vweird.f32 %v718
      %vm726 = vweird.f32 %v719
      %vm727 = vmor %vm725, %vm726
      %v728 = vsel %vm727, %v719, %v724
      %v729 = vmul.f32 %v716, %v728
      %v730 = vmul.f32 %v717, %v728
      %v731 = vmax.f32 %v729, 0.0
      %v732 = vmax.f32 %v730, 0.0
      %v733 = vadd.f32 %v591, %v731
      %v734 = vadd.f32 %v592, %v732
      %s735 = scalar_lea.vmem %s2, 8
      %v736 = vld [vmem:[%s735] sm:$0xff]
      %737 = vrot.lane.b32.xlu0 %v733, 1
      %v738 = vpop.permute.xlu0 %737
      %739 = vrot.lane.b32.xlu0 %v734, 1
      %v740 = vpop.permute.xlu0 %739
      %v741 = vsel %vm645, %v738, %v740
      %v742 = vsel %vm645, %v740, %v738
      %v743 = vsel %vm626, 0.0, %v742
      %v744 = vsel %vm627, 0.0, %v741
      %745 = vrot.lane.b32.xlu0 %v733, 127
      %v746 = vpop.permute.xlu0 %745
      %747 = vrot.lane.b32.xlu0 %v734, 127
      %v748 = vpop.permute.xlu0 %747
      %v749 = vsel %vm654, %v746, %v748
      %v750 = vsel %vm654, %v748, %v746
      %v751 = vsel %vm628, 0.0, %v749
      %v752 = vsel %vm629, 0.0, %v750
      %v754 = vsel %vm659, %v736, 0
      %756 = vmatpush.msra.mxu0 0.0
      %757 = vmatpush.msra.mxu0 0.0
      %758 = vmatpush.msra.mxu0 0.0
      %759 = vmatpush.msra.mxu0 0.0
      %760 = vmatpush.msra.mxu0 0.0
      %761 = vmatpush.msra.mxu0 0.0
      %762 = vmatpush.msra.mxu0 0.0
      %763 = vmatpush.msra.mxu0 0.0
      %764 = vmatpush.msra.mxu0 0.0
      %765 = vmatpush.msra.mxu0 0.0
      %766 = vmatpush.msra.mxu0 0.0
      %767 = vmatpush.msra.mxu0 0.0
      %768 = vmatpush.msra.mxu0 0.0
      %769 = vmatpush.msra.mxu0 %v751
      %770 = vmatpush.msra.mxu0 %v733
      %771 = vmatpush.msra.mxu0 %v743
      %772 = vmatmul.f32.gmra.mxu0 %v754
      %v773 = vpop.f32.mrf.mxu0
      %v774 = vadd.f32 0.0, %v773
      %775 = vdwg.mxu0
      %776 = vmatpush.msra.mxu0 0.0
      %777 = vmatpush.msra.mxu0 0.0
      %778 = vmatpush.msra.mxu0 0.0
      %779 = vmatpush.msra.mxu0 0.0
      %780 = vmatpush.msra.mxu0 0.0
      %781 = vmatpush.msra.mxu0 0.0
      %782 = vmatpush.msra.mxu0 0.0
      %783 = vmatpush.msra.mxu0 0.0
      %784 = vmatpush.msra.mxu0 0.0
      %785 = vmatpush.msra.mxu0 0.0
      %786 = vmatpush.msra.mxu0 0.0
      %787 = vmatpush.msra.mxu0 0.0
      %788 = vmatpush.msra.mxu0 0.0
      %789 = vmatpush.msra.mxu0 %v752
      %790 = vmatpush.msra.mxu0 %v734
      %791 = vmatpush.msra.mxu0 %v744
      %792 = vmatmul.f32.gmra.mxu0 %v754
      %v793 = vpop.f32.mrf.mxu0
      %v794 = vadd.f32 0.0, %v793
      %795 = vdwg.mxu0
      %v796 = vadd.f32 %v774, %v794
      %797 = vadd.xlane.f32.xlu0 %v796
      %v798 = vpop.xlane.xlu0 %797
      %v799 = vmul.f32 %v798, %v436
      %v800 = vmul.f32 %v774, %v774
      %v801 = vmul.f32 %v794, %v794
      %v802 = vadd.f32 %v800, %v801
      %803 = vadd.xlane.f32.xlu0 %v802
      %v804 = vpop.xlane.xlu0 %803
      %v805 = vmul.f32 %v804, %v436
      %v806 = vmul.f32 %v799, %v799
      %v807 = vsub.f32 %v805, %v806
      %v808 = vmax.f32 %v807, 0.0
      %v809 = vsub.f32 %v774, %v799
      %v810 = vsub.f32 %v794, %v799
      %v811 = vadd.f32 %v808, 1e-05
      %v812 = vrsqrt.pop %v811
      %v813 = vmul.f32 %v812, %v811
      %v814 = vmul.f32 %v813, %v812
      %v815 = vmul.f32 0.5, %v814
      %v816 = vsub.f32 1.5, %v815
      %v817 = vmul.f32 %v812, %v816
      %vm818 = vweird.f32 %v811
      %vm819 = vweird.f32 %v812
      %vm820 = vmor %vm818, %vm819
      %v821 = vsel %vm820, %v812, %v817
      %v822 = vmul.f32 %v809, %v821
      %v823 = vmul.f32 %v810, %v821
      %v824 = vmax.f32 %v822, 0.0
      %v825 = vmax.f32 %v823, 0.0
      %v826 = vadd.f32 %v593, %v824
      %v827 = vadd.f32 %v594, %v825
      %s828 = scalar_lea.vmem %s2, 16
      %v829 = vld [vmem:[%s828] sm:$0xff]
      %830 = vrot.lane.b32.xlu0 %v826, 1
      %v831 = vpop.permute.xlu0 %830
      %832 = vrot.lane.b32.xlu0 %v827, 1
      %v833 = vpop.permute.xlu0 %832
      %v834 = vsel %vm645, %v831, %v833
      %v835 = vsel %vm645, %v833, %v831
      %v836 = vsel %vm626, 0.0, %v835
      %v837 = vsel %vm627, 0.0, %v834
      %838 = vrot.lane.b32.xlu0 %v826, 127
      %v839 = vpop.permute.xlu0 %838
      %840 = vrot.lane.b32.xlu0 %v827, 127
      %v841 = vpop.permute.xlu0 %840
      %v842 = vsel %vm654, %v839, %v841
      %v843 = vsel %vm654, %v841, %v839
      %v844 = vsel %vm628, 0.0, %v842
      %v845 = vsel %vm629, 0.0, %v843
      %v847 = vsel %vm659, %v829, 0
      %849 = vmatpush.msra.mxu0 0.0
      %850 = vmatpush.msra.mxu0 0.0
      %851 = vmatpush.msra.mxu0 0.0
      %852 = vmatpush.msra.mxu0 0.0
      %853 = vmatpush.msra.mxu0 0.0
      %854 = vmatpush.msra.mxu0 0.0
      %855 = vmatpush.msra.mxu0 0.0
      %856 = vmatpush.msra.mxu0 0.0
      %857 = vmatpush.msra.mxu0 0.0
      %858 = vmatpush.msra.mxu0 0.0
      %859 = vmatpush.msra.mxu0 0.0
      %860 = vmatpush.msra.mxu0 0.0
      %861 = vmatpush.msra.mxu0 0.0
      %862 = vmatpush.msra.mxu0 %v844
      %863 = vmatpush.msra.mxu0 %v826
      %864 = vmatpush.msra.mxu0 %v836
      %865 = vmatmul.f32.gmra.mxu0 %v847
      %v866 = vpop.f32.mrf.mxu0
      %v867 = vadd.f32 0.0, %v866
      %868 = vdwg.mxu0
      %869 = vmatpush.msra.mxu0 0.0
      %870 = vmatpush.msra.mxu0 0.0
      %871 = vmatpush.msra.mxu0 0.0
      %872 = vmatpush.msra.mxu0 0.0
      %873 = vmatpush.msra.mxu0 0.0
      %874 = vmatpush.msra.mxu0 0.0
      %875 = vmatpush.msra.mxu0 0.0
      %876 = vmatpush.msra.mxu0 0.0
      %877 = vmatpush.msra.mxu0 0.0
      %878 = vmatpush.msra.mxu0 0.0
      %879 = vmatpush.msra.mxu0 0.0
      %880 = vmatpush.msra.mxu0 0.0
      %881 = vmatpush.msra.mxu0 0.0
      %882 = vmatpush.msra.mxu0 %v845
      %883 = vmatpush.msra.mxu0 %v827
      %884 = vmatpush.msra.mxu0 %v837
      %885 = vmatmul.f32.gmra.mxu0 %v847
      %v886 = vpop.f32.mrf.mxu0
      %v887 = vadd.f32 0.0, %v886
      %888 = vdwg.mxu0
      %v889 = vadd.f32 %v867, %v887
      %890 = vadd.xlane.f32.xlu0 %v889
      %v891 = vpop.xlane.xlu0 %890
      %v892 = vmul.f32 %v891, %v436
      %v893 = vmul.f32 %v867, %v867
      %v894 = vmul.f32 %v887, %v887
      %v895 = vadd.f32 %v893, %v894
      %896 = vadd.xlane.f32.xlu0 %v895
      %v897 = vpop.xlane.xlu0 %896
      %v898 = vmul.f32 %v897, %v436
      %v899 = vmul.f32 %v892, %v892
      %v900 = vsub.f32 %v898, %v899
      %v901 = vmax.f32 %v900, 0.0
      %v902 = vsub.f32 %v867, %v892
      %v903 = vsub.f32 %v887, %v892
      %v904 = vadd.f32 %v901, 1e-05
      %v905 = vrsqrt.pop %v904
      %v906 = vmul.f32 %v905, %v904
      %v907 = vmul.f32 %v906, %v905
      %v908 = vmul.f32 0.5, %v907
      %v909 = vsub.f32 1.5, %v908
      %v910 = vmul.f32 %v905, %v909
      %vm911 = vweird.f32 %v904
      %vm912 = vweird.f32 %v905
      %vm913 = vmor %vm911, %vm912
      %v914 = vsel %vm913, %v905, %v910
      %v915 = vmul.f32 %v902, %v914
      %v916 = vmul.f32 %v903, %v914
      %v917 = vmax.f32 %v915, 0.0
      %v918 = vmax.f32 %v916, 0.0
      %v919 = vadd.f32 %v595, %v917
      %v920 = vadd.f32 %v596, %v918
      %s921 = scalar_lea.vmem %s2, 24
      %v922 = vld [vmem:[%s921] sm:$0xff]
      %923 = vrot.lane.b32.xlu0 %v919, 1
      %v924 = vpop.permute.xlu0 %923
      %925 = vrot.lane.b32.xlu0 %v920, 1
      %v926 = vpop.permute.xlu0 %925
      %v927 = vsel %vm645, %v924, %v926
      %v928 = vsel %vm645, %v926, %v924
      %v929 = vsel %vm626, 0.0, %v928
      %v930 = vsel %vm627, 0.0, %v927
      %931 = vrot.lane.b32.xlu0 %v919, 127
      %v932 = vpop.permute.xlu0 %931
      %933 = vrot.lane.b32.xlu0 %v920, 127
      %v934 = vpop.permute.xlu0 %933
      %v935 = vsel %vm654, %v932, %v934
      %v936 = vsel %vm654, %v934, %v932
      %v937 = vsel %vm628, 0.0, %v935
      %v938 = vsel %vm629, 0.0, %v936
      %v940 = vsel %vm659, %v922, 0
      %942 = vmatpush.msra.mxu0 0.0
      %943 = vmatpush.msra.mxu0 0.0
      %944 = vmatpush.msra.mxu0 0.0
      %945 = vmatpush.msra.mxu0 0.0
      %946 = vmatpush.msra.mxu0 0.0
      %947 = vmatpush.msra.mxu0 0.0
      %948 = vmatpush.msra.mxu0 0.0
      %949 = vmatpush.msra.mxu0 0.0
      %950 = vmatpush.msra.mxu0 0.0
      %951 = vmatpush.msra.mxu0 0.0
      %952 = vmatpush.msra.mxu0 0.0
      %953 = vmatpush.msra.mxu0 0.0
      %954 = vmatpush.msra.mxu0 0.0
      %955 = vmatpush.msra.mxu0 %v937
      %956 = vmatpush.msra.mxu0 %v919
      %957 = vmatpush.msra.mxu0 %v929
      %958 = vmatmul.f32.gmra.mxu0 %v940
      %v959 = vpop.f32.mrf.mxu0
      %v960 = vadd.f32 0.0, %v959
      %961 = vdwg.mxu0
      %962 = vmatpush.msra.mxu0 0.0
      %963 = vmatpush.msra.mxu0 0.0
      %964 = vmatpush.msra.mxu0 0.0
      %965 = vmatpush.msra.mxu0 0.0
      %966 = vmatpush.msra.mxu0 0.0
      %967 = vmatpush.msra.mxu0 0.0
      %968 = vmatpush.msra.mxu0 0.0
      %969 = vmatpush.msra.mxu0 0.0
      %970 = vmatpush.msra.mxu0 0.0
      %971 = vmatpush.msra.mxu0 0.0
      %972 = vmatpush.msra.mxu0 0.0
      %973 = vmatpush.msra.mxu0 0.0
      %974 = vmatpush.msra.mxu0 0.0
      %975 = vmatpush.msra.mxu0 %v938
      %976 = vmatpush.msra.mxu0 %v920
      %977 = vmatpush.msra.mxu0 %v930
      %978 = vmatmul.f32.gmra.mxu0 %v940
      %v979 = vpop.f32.mrf.mxu0
      %v980 = vadd.f32 0.0, %v979
      %981 = vdwg.mxu0
      %v982 = vadd.f32 %v960, %v980
      %983 = vadd.xlane.f32.xlu0 %v982
      %v984 = vpop.xlane.xlu0 %983
      %v985 = vmul.f32 %v984, %v436
      %v986 = vmul.f32 %v960, %v960
      %v987 = vmul.f32 %v980, %v980
      %v988 = vadd.f32 %v986, %v987
      %989 = vadd.xlane.f32.xlu0 %v988
      %v990 = vpop.xlane.xlu0 %989
      %v991 = vmul.f32 %v990, %v436
      %v992 = vmul.f32 %v985, %v985
      %v993 = vsub.f32 %v991, %v992
      %v994 = vmax.f32 %v993, 0.0
      %v995 = vsub.f32 %v960, %v985
      %v996 = vsub.f32 %v980, %v985
      %v997 = vadd.f32 %v994, 1e-05
      %v998 = vrsqrt.pop %v997
      %v999 = vmul.f32 %v998, %v997
      %v1000 = vmul.f32 %v999, %v998
      %v1001 = vmul.f32 0.5, %v1000
      %v1002 = vsub.f32 1.5, %v1001
      %v1003 = vmul.f32 %v998, %v1002
      %vm1004 = vweird.f32 %v997
      %vm1005 = vweird.f32 %v998
      %vm1006 = vmor %vm1004, %vm1005
      %v1007 = vsel %vm1006, %v998, %v1003
      %v1008 = vmul.f32 %v995, %v1007
      %v1009 = vmul.f32 %v996, %v1007
      %v1010 = vmax.f32 %v1008, 0.0
      %v1011 = vmax.f32 %v1009, 0.0
      %v1012 = vadd.f32 %v597, %v1010
      %v1013 = vadd.f32 %v598, %v1011
      %s1014 = scalar_lea.vmem %s2, 32
      %v1015 = vld [vmem:[%s1014] sm:$0xff]
      %1016 = vrot.lane.b32.xlu0 %v1012, 1
      %v1017 = vpop.permute.xlu0 %1016
      %1018 = vrot.lane.b32.xlu0 %v1013, 1
      %v1019 = vpop.permute.xlu0 %1018
      %v1020 = vsel %vm645, %v1017, %v1019
      %v1021 = vsel %vm645, %v1019, %v1017
      %v1022 = vsel %vm626, 0.0, %v1021
      %v1023 = vsel %vm627, 0.0, %v1020
      %1024 = vrot.lane.b32.xlu0 %v1012, 127
      %v1025 = vpop.permute.xlu0 %1024
      %1026 = vrot.lane.b32.xlu0 %v1013, 127
      %v1027 = vpop.permute.xlu0 %1026
      %v1028 = vsel %vm654, %v1025, %v1027
      %v1029 = vsel %vm654, %v1027, %v1025
      %v1030 = vsel %vm628, 0.0, %v1028
      %v1031 = vsel %vm629, 0.0, %v1029
      %v1033 = vsel %vm659, %v1015, 0
      %1035 = vmatpush.msra.mxu0 0.0
      %1036 = vmatpush.msra.mxu0 0.0
      %1037 = vmatpush.msra.mxu0 0.0
      %1038 = vmatpush.msra.mxu0 0.0
      %1039 = vmatpush.msra.mxu0 0.0
      %1040 = vmatpush.msra.mxu0 0.0
      %1041 = vmatpush.msra.mxu0 0.0
      %1042 = vmatpush.msra.mxu0 0.0
      %1043 = vmatpush.msra.mxu0 0.0
      %1044 = vmatpush.msra.mxu0 0.0
      %1045 = vmatpush.msra.mxu0 0.0
      %1046 = vmatpush.msra.mxu0 0.0
      %1047 = vmatpush.msra.mxu0 0.0
      %1048 = vmatpush.msra.mxu0 %v1030
      %1049 = vmatpush.msra.mxu0 %v1012
      %1050 = vmatpush.msra.mxu0 %v1022
      %1051 = vmatmul.f32.gmra.mxu0 %v1033
      %v1052 = vpop.f32.mrf.mxu0
      %v1053 = vadd.f32 0.0, %v1052
      %1054 = vdwg.mxu0
      %1055 = vmatpush.msra.mxu0 0.0
      %1056 = vmatpush.msra.mxu0 0.0
      %1057 = vmatpush.msra.mxu0 0.0
      %1058 = vmatpush.msra.mxu0 0.0
      %1059 = vmatpush.msra.mxu0 0.0
      %1060 = vmatpush.msra.mxu0 0.0
      %1061 = vmatpush.msra.mxu0 0.0
      %1062 = vmatpush.msra.mxu0 0.0
      %1063 = vmatpush.msra.mxu0 0.0
      %1064 = vmatpush.msra.mxu0 0.0
      %1065 = vmatpush.msra.mxu0 0.0
      %1066 = vmatpush.msra.mxu0 0.0
      %1067 = vmatpush.msra.mxu0 0.0
      %1068 = vmatpush.msra.mxu0 %v1031
      %1069 = vmatpush.msra.mxu0 %v1013
      %1070 = vmatpush.msra.mxu0 %v1023
      %1071 = vmatmul.f32.gmra.mxu0 %v1033
      %v1072 = vpop.f32.mrf.mxu0
      %v1073 = vadd.f32 0.0, %v1072
      %1074 = vdwg.mxu0
      %v1075 = vadd.f32 %v1053, %v1073
      %1076 = vadd.xlane.f32.xlu0 %v1075
      %v1077 = vpop.xlane.xlu0 %1076
      %v1078 = vmul.f32 %v1077, %v436
      %v1079 = vmul.f32 %v1053, %v1053
      %v1080 = vmul.f32 %v1073, %v1073
      %v1081 = vadd.f32 %v1079, %v1080
      %1082 = vadd.xlane.f32.xlu0 %v1081
      %v1083 = vpop.xlane.xlu0 %1082
      %v1084 = vmul.f32 %v1083, %v436
      %v1085 = vmul.f32 %v1078, %v1078
      %v1086 = vsub.f32 %v1084, %v1085
      %v1087 = vmax.f32 %v1086, 0.0
      %v1088 = vsub.f32 %v1053, %v1078
      %v1089 = vsub.f32 %v1073, %v1078
      %v1090 = vadd.f32 %v1087, 1e-05
      %v1091 = vrsqrt.pop %v1090
      %v1092 = vmul.f32 %v1091, %v1090
      %v1093 = vmul.f32 %v1092, %v1091
      %v1094 = vmul.f32 0.5, %v1093
      %v1095 = vsub.f32 1.5, %v1094
      %v1096 = vmul.f32 %v1091, %v1095
      %vm1097 = vweird.f32 %v1090
      %vm1098 = vweird.f32 %v1091
      %vm1099 = vmor %vm1097, %vm1098
      %v1100 = vsel %vm1099, %v1091, %v1096
      %v1101 = vmul.f32 %v1088, %v1100
      %v1102 = vmul.f32 %v1089, %v1100
      %v1103 = vmax.f32 %v1101, 0.0
      %v1104 = vmax.f32 %v1102, 0.0
      %v1105 = vadd.f32 %v587, %v731
      %v1106 = vadd.f32 %v588, %v732
      %v1107 = vadd.f32 %v1105, %v824
      %v1108 = vadd.f32 %v1106, %v825
      %v1109 = vadd.f32 %v1107, %v917
      %v1110 = vadd.f32 %v1108, %v918
      %v1111 = vadd.f32 %v1109, %v1010
      %v1112 = vadd.f32 %v1110, %v1011
      %v1113 = vadd.f32 %v1111, %v1103
      %v1114 = vadd.f32 %v1112, %v1104
      %v1115 = vadd.f32 %v1113, %v1114
      %1116 = vadd.xlane.f32.xlu0 %v1115
      %v1117 = vpop.xlane.xlu0 %1116
      %v1118 = vmul.f32 %v1117, %v436
      %v1119 = vld [vmem:[%s3] sm:$0xff]
      %v1120 = vld [vmem:[%s3 + $0x8] sm:$0xff]
      %vm1121 = vcmask 130048
      %v1123 = vsel %vm1121, %v1119, 0
      %v1126 = vsel %vm1121, %v1120, 0
      %1128 = vmatpush.msra.mxu0 0.0
      %1129 = vmatpush.msra.mxu0 0.0
      %1130 = vmatpush.msra.mxu0 0.0
      %1131 = vmatpush.msra.mxu0 0.0
      %1132 = vmatpush.msra.mxu0 0.0
      %1133 = vmatpush.msra.mxu0 0.0
      %1134 = vmatpush.msra.mxu0 0.0
      %1135 = vmatpush.msra.mxu0 0.0
      %1136 = vmatpush.msra.mxu0 0.0
      %1137 = vmatpush.msra.mxu0 0.0
      %1138 = vmatpush.msra.mxu0 0.0
      %1139 = vmatpush.msra.mxu0 0.0
      %1140 = vmatpush.msra.mxu0 0.0
      %1141 = vmatpush.msra.mxu0 0.0
      %1142 = vmatpush.msra.mxu0 %v637
      %1143 = vmatpush.msra.mxu0 %v1118
      %1144 = vmatmul.f32.gmra.mxu0 %v1123
      %v1145 = vpop.f32.mrf.mxu0
      %v1146 = vadd.f32 0.0, %v1145
      %1147 = vmatmul.f32.gmra.mxu0 %v1126
      %v1148 = vpop.f32.mrf.mxu0
      %v1149 = vadd.f32 0.0, %v1148
      %1150 = vdwg.mxu0
      %v1151 = vld [vmem:[%s4] sm:$0xff]
      %v1152 = vld [vmem:[%s4 + $0x8] sm:$0xff]
      %v1153 = vld [vmem:[%s4 + $0x10] sm:$0xff]
      %v1154 = vld [vmem:[%s4 + $0x18] sm:$0xff]
      %v1155 = vld [vmem:[%s4 + $0x20] sm:$0xff]
      %v1156 = vld [vmem:[%s4 + $0x28] sm:$0xff]
      %v1158 = vsel %vm659, %v1151, 0
      %v1161 = vsel %vm659, %v1152, 0
      %v1164 = vsel %vm659, %v1153, 0
      %v1167 = vsel %vm659, %v1154, 0
      %v1170 = vsel %vm659, %v1155, 0
      %v1173 = vsel %vm659, %v1156, 0
      %1175 = vmatpush.msra.mxu0 0.0
      %1176 = vmatpush.msra.mxu0 0.0
      %1177 = vmatpush.msra.mxu0 0.0
      %1178 = vmatpush.msra.mxu0 0.0
      %1179 = vmatpush.msra.mxu0 0.0
      %1180 = vmatpush.msra.mxu0 0.0
      %1181 = vmatpush.msra.mxu0 0.0
      %1182 = vmatpush.msra.mxu0 0.0
      %1183 = vmatpush.msra.mxu0 0.0
      %1184 = vmatpush.msra.mxu0 0.0
      %1185 = vmatpush.msra.mxu0 0.0
      %1186 = vmatpush.msra.mxu0 0.0
      %1187 = vmatpush.msra.mxu0 0.0
      %1188 = vmatpush.msra.mxu0 %v637
      %1189 = vmatpush.msra.mxu0 %v1149
      %1190 = vmatpush.msra.mxu0 %v1146
      %1191 = vmatmul.f32.gmra.mxu0 %v1158
      %v1192 = vpop.f32.mrf.mxu0
      %v1193 = vadd.f32 0.0, %v1192
      %1194 = vmatmul.f32.gmra.mxu0 %v1161
      %v1195 = vpop.f32.mrf.mxu0
      %v1196 = vadd.f32 0.0, %v1195
      %1197 = vmatmul.f32.gmra.mxu0 %v1164
      %v1198 = vpop.f32.mrf.mxu0
      %v1199 = vadd.f32 0.0, %v1198
      %1200 = vmatmul.f32.gmra.mxu0 %v1167
      %v1201 = vpop.f32.mrf.mxu0
      %v1202 = vadd.f32 0.0, %v1201
      %1203 = vmatmul.f32.gmra.mxu0 %v1170
      %v1204 = vpop.f32.mrf.mxu0
      %v1205 = vadd.f32 0.0, %v1204
      %1206 = vmatmul.f32.gmra.mxu0 %v1173
      %v1207 = vpop.f32.mrf.mxu0
      %v1208 = vadd.f32 0.0, %v1207
      %1209 = vdwg.mxu0
      %v1210 = vmax.f32 %v1193, %v1196
      %v1211 = vmax.f32 %v1199, %v1202
      %v1212 = vmax.f32 %v1210, %v1211
      %v1213 = vmax.f32 %v1205, %v1208
      %v1214 = vmax.f32 %v1212, %v1213
      %v1215 = vsub.f32 %v1193, %v1214
      %v1216 = vmul.f32 %v1215, 1.442695
      %v1217 = vpow.pop %v1216
      %v1218 = vsub.f32 %v1196, %v1214
      %v1219 = vmul.f32 %v1218, 1.442695
      %v1220 = vpow.pop %v1219
      %v1221 = vsub.f32 %v1199, %v1214
      %v1222 = vmul.f32 %v1221, 1.442695
      %v1223 = vpow.pop %v1222
      %v1224 = vsub.f32 %v1202, %v1214
      %v1225 = vmul.f32 %v1224, 1.442695
      %v1226 = vpow.pop %v1225
      %v1227 = vsub.f32 %v1205, %v1214
      %v1228 = vmul.f32 %v1227, 1.442695
      %v1229 = vpow.pop %v1228
      %v1230 = vsub.f32 %v1208, %v1214
      %v1231 = vmul.f32 %v1230, 1.442695
      %v1232 = vpow.pop %v1231
      %v1233 = vadd.f32 %v1217, %v1220
      %v1234 = vadd.f32 %v1233, %v1223
      %v1235 = vadd.f32 %v1234, %v1226
      %v1236 = vadd.f32 %v1235, %v1229
      %v1237 = vadd.f32 %v1236, %v1232
      %v1238 = vrcp.pop %v1237
      %v1239 = vmul.f32 %v1237, %v1238
      %v1240 = vsub.f32 1.0, %v1239
      %v1241 = vmul.f32 %v1238, %v1240
      %v1242 = vadd.f32 %v1238, %v1241
      %vm1243 = vweird.f32 %v1237
      %vm1244 = vweird.f32 %v1238
      %vm1245 = vmor %vm1243, %vm1244
      %v1246 = vsel %vm1245, %v1238, %v1242
      %v1247 = vand.u32 2147483647, %v1237
      %vm1248 = vcmp.eq.f32.partialorder %v1247, 8.507059e+37
      %v1249 = vand.u32 %v1237, 2147483648
      %v1250 = vor.u32 1.1754944e-38, %v1249
      %v1251 = vsel %vm1248, %v1250, %v1246
      %v1252 = vmul.f32 1.0, %v1251
      %v1253 = vmul.f32 %v1217, %v1252
      %v1254 = vmul.f32 %v1220, %v1252
      %v1255 = vmul.f32 %v1223, %v1252
      %v1256 = vmul.f32 %v1226, %v1252
      %v1257 = vmul.f32 %v1229, %v1252
      %v1258 = vmul.f32 %v1232, %v1252
      %1260 = vset.pattern.permute.xlu0 0
      %1261 = vperm.xlu0 %1260, %v1253
      %v1262 = vpop.permute.xlu0 %1261
      %v1264 = vmul.f32 %v587, %v1262
      %v1265 = vmul.f32 %v588, %v1262
      %1267 = vset.pattern.permute.xlu0 0
      %1268 = vperm.xlu0 %1267, %v1254
      %v1269 = vpop.permute.xlu0 %1268
      %v1271 = vmul.f32 %v731, %v1269
      %v1272 = vmul.f32 %v732, %v1269
      %1274 = vset.pattern.permute.xlu0 0
      %1275 = vperm.xlu0 %1274, %v1255
      %v1276 = vpop.permute.xlu0 %1275
      %v1278 = vmul.f32 %v824, %v1276
      %v1279 = vmul.f32 %v825, %v1276
      %1281 = vset.pattern.permute.xlu0 0
      %1282 = vperm.xlu0 %1281, %v1256
      %v1283 = vpop.permute.xlu0 %1282
      %v1285 = vmul.f32 %v917, %v1283
      %v1286 = vmul.f32 %v918, %v1283
      %1288 = vset.pattern.permute.xlu0 0
      %1289 = vperm.xlu0 %1288, %v1257
      %v1290 = vpop.permute.xlu0 %1289
      %v1292 = vmul.f32 %v1010, %v1290
      %v1293 = vmul.f32 %v1011, %v1290
      %1295 = vset.pattern.permute.xlu0 0
      %1296 = vperm.xlu0 %1295, %v1258
      %v1297 = vpop.permute.xlu0 %1296
      %v1299 = vmul.f32 %v1103, %v1297
      %v1300 = vmul.f32 %v1104, %v1297
      %v1301 = vld [vmem:[%s5] sm:$0xff]
      %v1302 = vld [vmem:[%s5 + $0x8] sm:$0xff]
      %v1303 = vld [vmem:[%s5 + $0x10] sm:$0xff]
      %v1304 = vld [vmem:[%s5 + $0x18] sm:$0xff]
      %v1305 = vld [vmem:[%s5 + $0x20] sm:$0xff]
      %v1306 = vld [vmem:[%s5 + $0x28] sm:$0xff]
      %vm1307 = vcmask 457728
      %v1309 = vsel %vm1307, %v1301, 0
      %v1312 = vsel %vm1307, %v1302, 0
      %v1315 = vsel %vm1307, %v1303, 0
      %v1318 = vsel %vm1307, %v1304, 0
      %v1321 = vsel %vm1307, %v1305, 0
      %v1324 = vsel %vm1307, %v1306, 0
      %1326 = vmatpush.msra.mxu0 0.0
      %1327 = vmatpush.msra.mxu0 0.0
      %1328 = vmatpush.msra.mxu0 0.0
      %1329 = vmatpush.msra.mxu0 0.0
      %1330 = vmatpush.msra.mxu0 0.0
      %1331 = vmatpush.msra.mxu0 0.0
      %1332 = vmatpush.msra.mxu0 0.0
      %1333 = vmatpush.msra.mxu0 0.0
      %1334 = vmatpush.msra.mxu0 0.0
      %1335 = vmatpush.msra.mxu0 %v637
      %1336 = vmatpush.msra.mxu0 %v1299
      %1337 = vmatpush.msra.mxu0 %v1292
      %1338 = vmatpush.msra.mxu0 %v1285
      %1339 = vmatpush.msra.mxu0 %v1278
      %1340 = vmatpush.msra.mxu0 %v1271
      %1341 = vmatpush.msra.mxu0 %v1264
      %1342 = vmatmul.f32.gmra.mxu0 %v1309
      %v1343 = vpop.f32.mrf.mxu0
      %v1344 = vadd.f32 0.0, %v1343
      %1345 = vmatmul.f32.gmra.mxu0 %v1312
      %v1346 = vpop.f32.mrf.mxu0
      %v1347 = vadd.f32 0.0, %v1346
      %1348 = vmatmul.f32.gmra.mxu0 %v1315
      %v1349 = vpop.f32.mrf.mxu0
      %v1350 = vadd.f32 0.0, %v1349
      %1351 = vmatmul.f32.gmra.mxu0 %v1318
      %v1352 = vpop.f32.mrf.mxu0
      %v1353 = vadd.f32 0.0, %v1352
      %1354 = vmatmul.f32.gmra.mxu0 %v1321
      %v1355 = vpop.f32.mrf.mxu0
      %v1356 = vadd.f32 0.0, %v1355
      %1357 = vmatmul.f32.gmra.mxu0 %v1324
      %v1358 = vpop.f32.mrf.mxu0
      %v1359 = vadd.f32 0.0, %v1358
      %1360 = vdwg.mxu0
      %1361 = vmatpush.msra.mxu0 0.0
      %1362 = vmatpush.msra.mxu0 0.0
      %1363 = vmatpush.msra.mxu0 0.0
      %1364 = vmatpush.msra.mxu0 0.0
      %1365 = vmatpush.msra.mxu0 0.0
      %1366 = vmatpush.msra.mxu0 0.0
      %1367 = vmatpush.msra.mxu0 0.0
      %1368 = vmatpush.msra.mxu0 0.0
      %1369 = vmatpush.msra.mxu0 0.0
      %1370 = vmatpush.msra.mxu0 %v637
      %1371 = vmatpush.msra.mxu0 %v1300
      %1372 = vmatpush.msra.mxu0 %v1293
      %1373 = vmatpush.msra.mxu0 %v1286
      %1374 = vmatpush.msra.mxu0 %v1279
      %1375 = vmatpush.msra.mxu0 %v1272
      %1376 = vmatpush.msra.mxu0 %v1265
      %1377 = vmatmul.f32.gmra.mxu0 %v1309
      %v1378 = vpop.f32.mrf.mxu0
      %v1379 = vadd.f32 0.0, %v1378
      %1380 = vmatmul.f32.gmra.mxu0 %v1312
      %v1381 = vpop.f32.mrf.mxu0
      %v1382 = vadd.f32 0.0, %v1381
      %1383 = vmatmul.f32.gmra.mxu0 %v1315
      %v1384 = vpop.f32.mrf.mxu0
      %v1385 = vadd.f32 0.0, %v1384
      %1386 = vmatmul.f32.gmra.mxu0 %v1318
      %v1387 = vpop.f32.mrf.mxu0
      %v1388 = vadd.f32 0.0, %v1387
      %1389 = vmatmul.f32.gmra.mxu0 %v1321
      %v1390 = vpop.f32.mrf.mxu0
      %v1391 = vadd.f32 0.0, %v1390
      %1392 = vmatmul.f32.gmra.mxu0 %v1324
      %v1393 = vpop.f32.mrf.mxu0
      %v1394 = vadd.f32 0.0, %v1393
      %1395 = vdwg.mxu0
      %v1396 = vld [vmem:[%s6] sm:$0xff]
      %1397 = vrot.lane.b32.xlu0 %v1347, 16
      %v1398 = vpop.permute.xlu0 %1397
      %1399 = vrot.lane.b32.xlu0 %v1382, 16
      %v1400 = vpop.permute.xlu0 %1399
      %v1401 = vsel %vm630, %v1398, %v1400
      %v1402 = vsel %vm630, %v1400, %v1398
      %v1403 = vsel %vm630, 0.0, %v1402
      %v1404 = vsel %vm631, 0.0, %v1401
      %1405 = vrot.lane.b32.xlu0 %v1347, 112
      %v1406 = vpop.permute.xlu0 %1405
      %1407 = vrot.lane.b32.xlu0 %v1382, 112
      %v1408 = vpop.permute.xlu0 %1407
      %vm1409 = vcmp.lt.s32.totalorder %v600, 112
      %v1410 = vsel %vm1409, %v1406, %v1408
      %v1411 = vsel %vm1409, %v1408, %v1406
      %v1412 = vsel %vm632, 0.0, %v1410
      %v1413 = vsel %vm633, 0.0, %v1411
      %v1415 = vsel %vm659, %v1396, 0
      %1417 = vmatpush.msra.mxu0 0.0
      %1418 = vmatpush.msra.mxu0 0.0
      %1419 = vmatpush.msra.mxu0 0.0
      %1420 = vmatpush.msra.mxu0 0.0
      %1421 = vmatpush.msra.mxu0 0.0
      %1422 = vmatpush.msra.mxu0 0.0
      %1423 = vmatpush.msra.mxu0 0.0
      %1424 = vmatpush.msra.mxu0 0.0
      %1425 = vmatpush.msra.mxu0 0.0
      %1426 = vmatpush.msra.mxu0 0.0
      %1427 = vmatpush.msra.mxu0 0.0
      %1428 = vmatpush.msra.mxu0 0.0
      %1429 = vmatpush.msra.mxu0 0.0
      %1430 = vmatpush.msra.mxu0 %v1412
      %1431 = vmatpush.msra.mxu0 %v1347
      %1432 = vmatpush.msra.mxu0 %v1403
      %1433 = vmatmul.f32.gmra.mxu0 %v1415
      %v1434 = vpop.f32.mrf.mxu0
      %v1435 = vadd.f32 0.0, %v1434
      %1436 = vdwg.mxu0
      %1437 = vmatpush.msra.mxu0 0.0
      %1438 = vmatpush.msra.mxu0 0.0
      %1439 = vmatpush.msra.mxu0 0.0
      %1440 = vmatpush.msra.mxu0 0.0
      %1441 = vmatpush.msra.mxu0 0.0
      %1442 = vmatpush.msra.mxu0 0.0
      %1443 = vmatpush.msra.mxu0 0.0
      %1444 = vmatpush.msra.mxu0 0.0
      %1445 = vmatpush.msra.mxu0 0.0
      %1446 = vmatpush.msra.mxu0 0.0
      %1447 = vmatpush.msra.mxu0 0.0
      %1448 = vmatpush.msra.mxu0 0.0
      %1449 = vmatpush.msra.mxu0 0.0
      %1450 = vmatpush.msra.mxu0 %v1413
      %1451 = vmatpush.msra.mxu0 %v1382
      %1452 = vmatpush.msra.mxu0 %v1404
      %1453 = vmatmul.f32.gmra.mxu0 %v1415
      %v1454 = vpop.f32.mrf.mxu0
      %v1455 = vadd.f32 0.0, %v1454
      %1456 = vdwg.mxu0
      %v1457 = vadd.f32 %v1435, %v1455
      %1458 = vadd.xlane.f32.xlu0 %v1457
      %v1459 = vpop.xlane.xlu0 %1458
      %v1460 = vmul.f32 %v1459, %v436
      %v1461 = vmul.f32 %v1435, %v1435
      %v1462 = vmul.f32 %v1455, %v1455
      %v1463 = vadd.f32 %v1461, %v1462
      %1464 = vadd.xlane.f32.xlu0 %v1463
      %v1465 = vpop.xlane.xlu0 %1464
      %v1466 = vmul.f32 %v1465, %v436
      %v1467 = vmul.f32 %v1460, %v1460
      %v1468 = vsub.f32 %v1466, %v1467
      %v1469 = vmax.f32 %v1468, 0.0
      %v1470 = vsub.f32 %v1435, %v1460
      %v1471 = vsub.f32 %v1455, %v1460
      %v1472 = vadd.f32 %v1469, 1e-05
      %v1473 = vrsqrt.pop %v1472
      %v1474 = vmul.f32 %v1473, %v1472
      %v1475 = vmul.f32 %v1474, %v1473
      %v1476 = vmul.f32 0.5, %v1475
      %v1477 = vsub.f32 1.5, %v1476
      %v1478 = vmul.f32 %v1473, %v1477
      %vm1479 = vweird.f32 %v1472
      %vm1480 = vweird.f32 %v1473
      %vm1481 = vmor %vm1479, %vm1480
      %v1482 = vsel %vm1481, %v1473, %v1478
      %v1483 = vmul.f32 %v1470, %v1482
      %v1484 = vmul.f32 %v1471, %v1482
      %v1485 = vmax.f32 %v1483, 0.0
      %v1486 = vmax.f32 %v1484, 0.0
      %v1487 = vadd.f32 %v1485, %v1350
      %v1488 = vadd.f32 %v1486, %v1385
      %s1489 = scalar_lea.vmem %s6, 8
      %v1490 = vld [vmem:[%s1489] sm:$0xff]
      %1491 = vrot.lane.b32.xlu0 %v1487, 16
      %v1492 = vpop.permute.xlu0 %1491
      %1493 = vrot.lane.b32.xlu0 %v1488, 16
      %v1494 = vpop.permute.xlu0 %1493
      %v1495 = vsel %vm630, %v1492, %v1494
      %v1496 = vsel %vm630, %v1494, %v1492
      %v1497 = vsel %vm630, 0.0, %v1496
      %v1498 = vsel %vm631, 0.0, %v1495
      %1499 = vrot.lane.b32.xlu0 %v1487, 112
      %v1500 = vpop.permute.xlu0 %1499
      %1501 = vrot.lane.b32.xlu0 %v1488, 112
      %v1502 = vpop.permute.xlu0 %1501
      %v1503 = vsel %vm1409, %v1500, %v1502
      %v1504 = vsel %vm1409, %v1502, %v1500
      %v1505 = vsel %vm632, 0.0, %v1503
      %v1506 = vsel %vm633, 0.0, %v1504
      %v1508 = vsel %vm659, %v1490, 0
      %1510 = vmatpush.msra.mxu0 0.0
      %1511 = vmatpush.msra.mxu0 0.0
      %1512 = vmatpush.msra.mxu0 0.0
      %1513 = vmatpush.msra.mxu0 0.0
      %1514 = vmatpush.msra.mxu0 0.0
      %1515 = vmatpush.msra.mxu0 0.0
      %1516 = vmatpush.msra.mxu0 0.0
      %1517 = vmatpush.msra.mxu0 0.0
      %1518 = vmatpush.msra.mxu0 0.0
      %1519 = vmatpush.msra.mxu0 0.0
      %1520 = vmatpush.msra.mxu0 0.0
      %1521 = vmatpush.msra.mxu0 0.0
      %1522 = vmatpush.msra.mxu0 0.0
      %1523 = vmatpush.msra.mxu0 %v1505
      %1524 = vmatpush.msra.mxu0 %v1487
      %1525 = vmatpush.msra.mxu0 %v1497
      %1526 = vmatmul.f32.gmra.mxu0 %v1508
      %v1527 = vpop.f32.mrf.mxu0
      %v1528 = vadd.f32 0.0, %v1527
      %1529 = vdwg.mxu0
      %1530 = vmatpush.msra.mxu0 0.0
      %1531 = vmatpush.msra.mxu0 0.0
      %1532 = vmatpush.msra.mxu0 0.0
      %1533 = vmatpush.msra.mxu0 0.0
      %1534 = vmatpush.msra.mxu0 0.0
      %1535 = vmatpush.msra.mxu0 0.0
      %1536 = vmatpush.msra.mxu0 0.0
      %1537 = vmatpush.msra.mxu0 0.0
      %1538 = vmatpush.msra.mxu0 0.0
      %1539 = vmatpush.msra.mxu0 0.0
      %1540 = vmatpush.msra.mxu0 0.0
      %1541 = vmatpush.msra.mxu0 0.0
      %1542 = vmatpush.msra.mxu0 0.0
      %1543 = vmatpush.msra.mxu0 %v1506
      %1544 = vmatpush.msra.mxu0 %v1488
      %1545 = vmatpush.msra.mxu0 %v1498
      %1546 = vmatmul.f32.gmra.mxu0 %v1508
      %v1547 = vpop.f32.mrf.mxu0
      %v1548 = vadd.f32 0.0, %v1547
      %1549 = vdwg.mxu0
      %v1550 = vadd.f32 %v1528, %v1548
      %1551 = vadd.xlane.f32.xlu0 %v1550
      %v1552 = vpop.xlane.xlu0 %1551
      %v1553 = vmul.f32 %v1552, %v436
      %v1554 = vmul.f32 %v1528, %v1528
      %v1555 = vmul.f32 %v1548, %v1548
      %v1556 = vadd.f32 %v1554, %v1555
      %1557 = vadd.xlane.f32.xlu0 %v1556
      %v1558 = vpop.xlane.xlu0 %1557
      %v1559 = vmul.f32 %v1558, %v436
      %v1560 = vmul.f32 %v1553, %v1553
      %v1561 = vsub.f32 %v1559, %v1560
      %v1562 = vmax.f32 %v1561, 0.0
      %v1563 = vsub.f32 %v1528, %v1553
      %v1564 = vsub.f32 %v1548, %v1553
      %v1565 = vadd.f32 %v1562, 1e-05
      %v1566 = vrsqrt.pop %v1565
      %v1567 = vmul.f32 %v1566, %v1565
      %v1568 = vmul.f32 %v1567, %v1566
      %v1569 = vmul.f32 0.5, %v1568
      %v1570 = vsub.f32 1.5, %v1569
      %v1571 = vmul.f32 %v1566, %v1570
      %vm1572 = vweird.f32 %v1565
      %vm1573 = vweird.f32 %v1566
      %vm1574 = vmor %vm1572, %vm1573
      %v1575 = vsel %vm1574, %v1566, %v1571
      %v1576 = vmul.f32 %v1563, %v1575
      %v1577 = vmul.f32 %v1564, %v1575
      %v1578 = vmax.f32 %v1576, 0.0
      %v1579 = vmax.f32 %v1577, 0.0
      %v1580 = vadd.f32 %v1578, %v1353
      %v1581 = vadd.f32 %v1579, %v1388
      %s1582 = scalar_lea.vmem %s6, 16
      %v1583 = vld [vmem:[%s1582] sm:$0xff]
      %1584 = vrot.lane.b32.xlu0 %v1580, 16
      %v1585 = vpop.permute.xlu0 %1584
      %1586 = vrot.lane.b32.xlu0 %v1581, 16
      %v1587 = vpop.permute.xlu0 %1586
      %v1588 = vsel %vm630, %v1585, %v1587
      %v1589 = vsel %vm630, %v1587, %v1585
      %v1590 = vsel %vm630, 0.0, %v1589
      %v1591 = vsel %vm631, 0.0, %v1588
      %1592 = vrot.lane.b32.xlu0 %v1580, 112
      %v1593 = vpop.permute.xlu0 %1592
      %1594 = vrot.lane.b32.xlu0 %v1581, 112
      %v1595 = vpop.permute.xlu0 %1594
      %v1596 = vsel %vm1409, %v1593, %v1595
      %v1597 = vsel %vm1409, %v1595, %v1593
      %v1598 = vsel %vm632, 0.0, %v1596
      %v1599 = vsel %vm633, 0.0, %v1597
      %v1601 = vsel %vm659, %v1583, 0
      %1603 = vmatpush.msra.mxu0 0.0
      %1604 = vmatpush.msra.mxu0 0.0
      %1605 = vmatpush.msra.mxu0 0.0
      %1606 = vmatpush.msra.mxu0 0.0
      %1607 = vmatpush.msra.mxu0 0.0
      %1608 = vmatpush.msra.mxu0 0.0
      %1609 = vmatpush.msra.mxu0 0.0
      %1610 = vmatpush.msra.mxu0 0.0
      %1611 = vmatpush.msra.mxu0 0.0
      %1612 = vmatpush.msra.mxu0 0.0
      %1613 = vmatpush.msra.mxu0 0.0
      %1614 = vmatpush.msra.mxu0 0.0
      %1615 = vmatpush.msra.mxu0 0.0
      %1616 = vmatpush.msra.mxu0 %v1598
      %1617 = vmatpush.msra.mxu0 %v1580
      %1618 = vmatpush.msra.mxu0 %v1590
      %1619 = vmatmul.f32.gmra.mxu0 %v1601
      %v1620 = vpop.f32.mrf.mxu0
      %v1621 = vadd.f32 0.0, %v1620
      %1622 = vdwg.mxu0
      %1623 = vmatpush.msra.mxu0 0.0
      %1624 = vmatpush.msra.mxu0 0.0
      %1625 = vmatpush.msra.mxu0 0.0
      %1626 = vmatpush.msra.mxu0 0.0
      %1627 = vmatpush.msra.mxu0 0.0
      %1628 = vmatpush.msra.mxu0 0.0
      %1629 = vmatpush.msra.mxu0 0.0
      %1630 = vmatpush.msra.mxu0 0.0
      %1631 = vmatpush.msra.mxu0 0.0
      %1632 = vmatpush.msra.mxu0 0.0
      %1633 = vmatpush.msra.mxu0 0.0
      %1634 = vmatpush.msra.mxu0 0.0
      %1635 = vmatpush.msra.mxu0 0.0
      %1636 = vmatpush.msra.mxu0 %v1599
      %1637 = vmatpush.msra.mxu0 %v1581
      %1638 = vmatpush.msra.mxu0 %v1591
      %1639 = vmatmul.f32.gmra.mxu0 %v1601
      %v1640 = vpop.f32.mrf.mxu0
      %v1641 = vadd.f32 0.0, %v1640
      %1642 = vdwg.mxu0
      %v1643 = vadd.f32 %v1621, %v1641
      %1644 = vadd.xlane.f32.xlu0 %v1643
      %v1645 = vpop.xlane.xlu0 %1644
      %v1646 = vmul.f32 %v1645, %v436
      %v1647 = vmul.f32 %v1621, %v1621
      %v1648 = vmul.f32 %v1641, %v1641
      %v1649 = vadd.f32 %v1647, %v1648
      %1650 = vadd.xlane.f32.xlu0 %v1649
      %v1651 = vpop.xlane.xlu0 %1650
      %v1652 = vmul.f32 %v1651, %v436
      %v1653 = vmul.f32 %v1646, %v1646
      %v1654 = vsub.f32 %v1652, %v1653
      %v1655 = vmax.f32 %v1654, 0.0
      %v1656 = vsub.f32 %v1621, %v1646
      %v1657 = vsub.f32 %v1641, %v1646
      %v1658 = vadd.f32 %v1655, 1e-05
      %v1659 = vrsqrt.pop %v1658
      %v1660 = vmul.f32 %v1659, %v1658
      %v1661 = vmul.f32 %v1660, %v1659
      %v1662 = vmul.f32 0.5, %v1661
      %v1663 = vsub.f32 1.5, %v1662
      %v1664 = vmul.f32 %v1659, %v1663
      %vm1665 = vweird.f32 %v1658
      %vm1666 = vweird.f32 %v1659
      %vm1667 = vmor %vm1665, %vm1666
      %v1668 = vsel %vm1667, %v1659, %v1664
      %v1669 = vmul.f32 %v1656, %v1668
      %v1670 = vmul.f32 %v1657, %v1668
      %v1671 = vmax.f32 %v1669, 0.0
      %v1672 = vmax.f32 %v1670, 0.0
      %v1673 = vadd.f32 %v1671, %v1356
      %v1674 = vadd.f32 %v1672, %v1391
      %s1675 = scalar_lea.vmem %s6, 24
      %v1676 = vld [vmem:[%s1675] sm:$0xff]
      %1677 = vrot.lane.b32.xlu0 %v1673, 16
      %v1678 = vpop.permute.xlu0 %1677
      %1679 = vrot.lane.b32.xlu0 %v1674, 16
      %v1680 = vpop.permute.xlu0 %1679
      %v1681 = vsel %vm630, %v1678, %v1680
      %v1682 = vsel %vm630, %v1680, %v1678
      %v1683 = vsel %vm630, 0.0, %v1682
      %v1684 = vsel %vm631, 0.0, %v1681
      %1685 = vrot.lane.b32.xlu0 %v1673, 112
      %v1686 = vpop.permute.xlu0 %1685
      %1687 = vrot.lane.b32.xlu0 %v1674, 112
      %v1688 = vpop.permute.xlu0 %1687
      %v1689 = vsel %vm1409, %v1686, %v1688
      %v1690 = vsel %vm1409, %v1688, %v1686
      %v1691 = vsel %vm632, 0.0, %v1689
      %v1692 = vsel %vm633, 0.0, %v1690
      %v1694 = vsel %vm659, %v1676, 0
      %1696 = vmatpush.msra.mxu0 0.0
      %1697 = vmatpush.msra.mxu0 0.0
      %1698 = vmatpush.msra.mxu0 0.0
      %1699 = vmatpush.msra.mxu0 0.0
      %1700 = vmatpush.msra.mxu0 0.0
      %1701 = vmatpush.msra.mxu0 0.0
      %1702 = vmatpush.msra.mxu0 0.0
      %1703 = vmatpush.msra.mxu0 0.0
      %1704 = vmatpush.msra.mxu0 0.0
      %1705 = vmatpush.msra.mxu0 0.0
      %1706 = vmatpush.msra.mxu0 0.0
      %1707 = vmatpush.msra.mxu0 0.0
      %1708 = vmatpush.msra.mxu0 0.0
      %1709 = vmatpush.msra.mxu0 %v1691
      %1710 = vmatpush.msra.mxu0 %v1673
      %1711 = vmatpush.msra.mxu0 %v1683
      %1712 = vmatmul.f32.gmra.mxu0 %v1694
      %v1713 = vpop.f32.mrf.mxu0
      %v1714 = vadd.f32 0.0, %v1713
      %1715 = vdwg.mxu0
      %1716 = vmatpush.msra.mxu0 0.0
      %1717 = vmatpush.msra.mxu0 0.0
      %1718 = vmatpush.msra.mxu0 0.0
      %1719 = vmatpush.msra.mxu0 0.0
      %1720 = vmatpush.msra.mxu0 0.0
      %1721 = vmatpush.msra.mxu0 0.0
      %1722 = vmatpush.msra.mxu0 0.0
      %1723 = vmatpush.msra.mxu0 0.0
      %1724 = vmatpush.msra.mxu0 0.0
      %1725 = vmatpush.msra.mxu0 0.0
      %1726 = vmatpush.msra.mxu0 0.0
      %1727 = vmatpush.msra.mxu0 0.0
      %1728 = vmatpush.msra.mxu0 0.0
      %1729 = vmatpush.msra.mxu0 %v1692
      %1730 = vmatpush.msra.mxu0 %v1674
      %1731 = vmatpush.msra.mxu0 %v1684
      %1732 = vmatmul.f32.gmra.mxu0 %v1694
      %v1733 = vpop.f32.mrf.mxu0
      %v1734 = vadd.f32 0.0, %v1733
      %1735 = vdwg.mxu0
      %v1736 = vadd.f32 %v1714, %v1734
      %1737 = vadd.xlane.f32.xlu0 %v1736
      %v1738 = vpop.xlane.xlu0 %1737
      %v1739 = vmul.f32 %v1738, %v436
      %v1740 = vmul.f32 %v1714, %v1714
      %v1741 = vmul.f32 %v1734, %v1734
      %v1742 = vadd.f32 %v1740, %v1741
      %1743 = vadd.xlane.f32.xlu0 %v1742
      %v1744 = vpop.xlane.xlu0 %1743
      %v1745 = vmul.f32 %v1744, %v436
      %v1746 = vmul.f32 %v1739, %v1739
      %v1747 = vsub.f32 %v1745, %v1746
      %v1748 = vmax.f32 %v1747, 0.0
      %v1749 = vsub.f32 %v1714, %v1739
      %v1750 = vsub.f32 %v1734, %v1739
      %v1751 = vadd.f32 %v1748, 1e-05
      %v1752 = vrsqrt.pop %v1751
      %v1753 = vmul.f32 %v1752, %v1751
      %v1754 = vmul.f32 %v1753, %v1752
      %v1755 = vmul.f32 0.5, %v1754
      %v1756 = vsub.f32 1.5, %v1755
      %v1757 = vmul.f32 %v1752, %v1756
      %vm1758 = vweird.f32 %v1751
      %vm1759 = vweird.f32 %v1752
      %vm1760 = vmor %vm1758, %vm1759
      %v1761 = vsel %vm1760, %v1752, %v1757
      %v1762 = vmul.f32 %v1749, %v1761
      %v1763 = vmul.f32 %v1750, %v1761
      %v1764 = vmax.f32 %v1762, 0.0
      %v1765 = vmax.f32 %v1763, 0.0
      %v1766 = vadd.f32 %v1764, %v1359
      %v1767 = vadd.f32 %v1765, %v1394
      %s1768 = scalar_lea.vmem %s6, 32
      %v1769 = vld [vmem:[%s1768] sm:$0xff]
      %1770 = vrot.lane.b32.xlu0 %v1766, 16
      %v1771 = vpop.permute.xlu0 %1770
      %1772 = vrot.lane.b32.xlu0 %v1767, 16
      %v1773 = vpop.permute.xlu0 %1772
      %v1774 = vsel %vm630, %v1771, %v1773
      %v1775 = vsel %vm630, %v1773, %v1771
      %v1776 = vsel %vm630, 0.0, %v1775
      %v1777 = vsel %vm631, 0.0, %v1774
      %1778 = vrot.lane.b32.xlu0 %v1766, 112
      %v1779 = vpop.permute.xlu0 %1778
      %1780 = vrot.lane.b32.xlu0 %v1767, 112
      %v1781 = vpop.permute.xlu0 %1780
      %v1782 = vsel %vm1409, %v1779, %v1781
      %v1783 = vsel %vm1409, %v1781, %v1779
      %v1784 = vsel %vm632, 0.0, %v1782
      %v1785 = vsel %vm633, 0.0, %v1783
      %v1787 = vsel %vm659, %v1769, 0
      %1789 = vmatpush.msra.mxu0 0.0
      %1790 = vmatpush.msra.mxu0 0.0
      %1791 = vmatpush.msra.mxu0 0.0
      %1792 = vmatpush.msra.mxu0 0.0
      %1793 = vmatpush.msra.mxu0 0.0
      %1794 = vmatpush.msra.mxu0 0.0
      %1795 = vmatpush.msra.mxu0 0.0
      %1796 = vmatpush.msra.mxu0 0.0
      %1797 = vmatpush.msra.mxu0 0.0
      %1798 = vmatpush.msra.mxu0 0.0
      %1799 = vmatpush.msra.mxu0 0.0
      %1800 = vmatpush.msra.mxu0 0.0
      %1801 = vmatpush.msra.mxu0 0.0
      %1802 = vmatpush.msra.mxu0 %v1784
      %1803 = vmatpush.msra.mxu0 %v1766
      %1804 = vmatpush.msra.mxu0 %v1776
      %1805 = vmatmul.f32.gmra.mxu0 %v1787
      %v1806 = vpop.f32.mrf.mxu0
      %v1807 = vadd.f32 0.0, %v1806
      %1808 = vdwg.mxu0
      %1809 = vmatpush.msra.mxu0 0.0
      %1810 = vmatpush.msra.mxu0 0.0
      %1811 = vmatpush.msra.mxu0 0.0
      %1812 = vmatpush.msra.mxu0 0.0
      %1813 = vmatpush.msra.mxu0 0.0
      %1814 = vmatpush.msra.mxu0 0.0
      %1815 = vmatpush.msra.mxu0 0.0
      %1816 = vmatpush.msra.mxu0 0.0
      %1817 = vmatpush.msra.mxu0 0.0
      %1818 = vmatpush.msra.mxu0 0.0
      %1819 = vmatpush.msra.mxu0 0.0
      %1820 = vmatpush.msra.mxu0 0.0
      %1821 = vmatpush.msra.mxu0 0.0
      %1822 = vmatpush.msra.mxu0 %v1785
      %1823 = vmatpush.msra.mxu0 %v1767
      %1824 = vmatpush.msra.mxu0 %v1777
      %1825 = vmatmul.f32.gmra.mxu0 %v1787
      %v1826 = vpop.f32.mrf.mxu0
      %v1827 = vadd.f32 0.0, %v1826
      %1828 = vdwg.mxu0
      %v1829 = vadd.f32 %v1807, %v1827
      %1830 = vadd.xlane.f32.xlu0 %v1829
      %v1831 = vpop.xlane.xlu0 %1830
      %v1832 = vmul.f32 %v1831, %v436
      %v1833 = vmul.f32 %v1807, %v1807
      %v1834 = vmul.f32 %v1827, %v1827
      %v1835 = vadd.f32 %v1833, %v1834
      %1836 = vadd.xlane.f32.xlu0 %v1835
      %v1837 = vpop.xlane.xlu0 %1836
      %v1838 = vmul.f32 %v1837, %v436
      %v1839 = vmul.f32 %v1832, %v1832
      %v1840 = vsub.f32 %v1838, %v1839
      %v1841 = vmax.f32 %v1840, 0.0
      %v1842 = vsub.f32 %v1807, %v1832
      %v1843 = vsub.f32 %v1827, %v1832
      %v1844 = vadd.f32 %v1841, 1e-05
      %v1845 = vrsqrt.pop %v1844
      %v1846 = vmul.f32 %v1845, %v1844
      %v1847 = vmul.f32 %v1846, %v1845
      %v1848 = vmul.f32 0.5, %v1847
      %v1849 = vsub.f32 1.5, %v1848
      %v1850 = vmul.f32 %v1845, %v1849
      %vm1851 = vweird.f32 %v1844
      %vm1852 = vweird.f32 %v1845
      %vm1853 = vmor %vm1851, %vm1852
      %v1854 = vsel %vm1853, %v1845, %v1850
      %v1855 = vmul.f32 %v1842, %v1854
      %v1856 = vmul.f32 %v1843, %v1854
      %v1857 = vmax.f32 %v1855, 0.0
      %v1858 = vmax.f32 %v1856, 0.0
      %v1859 = vld [vmem:[%s7] sm:$0xff]
      %v1860 = vld [vmem:[%s7 + $0x8] sm:$0xf]
      %v1862 = vsel %vm1307, %v1859, 0
      %v1865 = vsel %vm1307, %v1860, 0
      %1867 = vmatpush.msra.mxu0 0.0
      %1868 = vmatpush.msra.mxu0 0.0
      %1869 = vmatpush.msra.mxu0 0.0
      %1870 = vmatpush.msra.mxu0 0.0
      %1871 = vmatpush.msra.mxu0 0.0
      %1872 = vmatpush.msra.mxu0 0.0
      %1873 = vmatpush.msra.mxu0 0.0
      %1874 = vmatpush.msra.mxu0 0.0
      %1875 = vmatpush.msra.mxu0 0.0
      %1876 = vmatpush.msra.mxu0 %v637
      %1877 = vmatpush.msra.mxu0 %v1857
      %1878 = vmatpush.msra.mxu0 %v1764
      %1879 = vmatpush.msra.mxu0 %v1671
      %1880 = vmatpush.msra.mxu0 %v1578
      %1881 = vmatpush.msra.mxu0 %v1485
      %1882 = vmatpush.msra.mxu0 %v1344
      %1883 = vmatmul.f32.gmra.mxu0 %v1862
      %v1884 = vpop.f32.mrf.mxu0
      %v1885 = vadd.f32 %v306, %v1884
      %1886 = vmatmul.f32.gmra.mxu0 %v1865
      %v1887 = vpop.f32.mrf.mxu0
      %v1888 = vadd.f32 %v308, %v1887
      %1889 = vdwg.mxu0
      %1890 = vmatpush.msra.mxu0 0.0
      %1891 = vmatpush.msra.mxu0 0.0
      %1892 = vmatpush.msra.mxu0 0.0
      %1893 = vmatpush.msra.mxu0 0.0
      %1894 = vmatpush.msra.mxu0 0.0
      %1895 = vmatpush.msra.mxu0 0.0
      %1896 = vmatpush.msra.mxu0 0.0
      %1897 = vmatpush.msra.mxu0 0.0
      %1898 = vmatpush.msra.mxu0 0.0
      %1899 = vmatpush.msra.mxu0 %v637
      %1900 = vmatpush.msra.mxu0 %v1858
      %1901 = vmatpush.msra.mxu0 %v1765
      %1902 = vmatpush.msra.mxu0 %v1672
      %1903 = vmatpush.msra.mxu0 %v1579
      %1904 = vmatpush.msra.mxu0 %v1486
      %1905 = vmatpush.msra.mxu0 %v1379
      %1906 = vmatmul.f32.gmra.mxu0 %v1862
      %v1907 = vpop.f32.mrf.mxu0
      %v1908 = vadd.f32 %v307, %v1907
      %1909 = vmatmul.f32.gmra.mxu0 %v1865
      %v1910 = vpop.f32.mrf.mxu0
      %v1911 = vadd.f32 %v309, %v1910
      %1912 = vdwg.mxu0
      %v1913 = vmax.f32 %v1885, 0.0
      %v1914 = vmax.f32 %v1908, 0.0
      %v1915 = vmax.f32 %v1888, 0.0
      %v1916 = vmax.f32 %v1911, 0.0
      %1917 = vst [vmem:[%s305] sm:$0xff] %v1913
      %1918 = vst [vmem:[%s305 + $0x8] sm:$0xff] %v1914
      %1919 = vst [vmem:[%s305 + $0x10] sm:$0xf] %v1915
      %1920 = vst [vmem:[%s305 + $0x18] sm:$0xf] %v1916
      %p1921 = scmp.lt.s32.totalorder %s19, 1
      %s1922 = scalar_select %p1921, %s19, 1
      %s1923 = smul.addr %s1922, 4
      %s1924 = smul.addr %s1923, 8
      %s1925 = scalar_lea.vmem %s8, %s1924
      // Predicated region
      $region53: #{double_conv_forward.1} parent=51 // pred_check
        %p1926 = pneg %p210
      $region54: #{double_conv_forward.1} parent=51 // pred_check_branch
        %1928 = sbr.rel (%p1926) target = $region56
      $region55: #{double_conv_forward.1} parent=51 // pred_region
        _
      $region56: #{double_conv_forward.1} parent=51 // pred_fallthru
        _
    $region52: #{double_conv_forward.1} parent=5 // pred_fallthru
      _
    %p1929 = scmp.le.s32.totalorder 2, %s14
    // Predicated region
    $region57: #{double_conv_forward.1} parent=5 // pred_check
      %p1930 = pneg %p1929
    $region58: #{double_conv_forward.1} parent=5 // pred_check_branch
      %1932 = sbr.rel (%p1930) target = $region60
    $region59: #{double_conv_forward.1} parent=5 // pred_region
      %s1933 = ssub.s32 %s14, 2
      // Predicated region
      $region61: #{double_conv_forward.1} parent=59 // pred_check
        %p1934 = pneg %p216
      $region62: #{double_conv_forward.1} parent=59 // pred_check_branch
        %1936 = sbr.rel (%p1934) target = $region64
      $region63: #{double_conv_forward.1} parent=59 // pred_region
        %p1937 = scmp.lt.s32.totalorder %s20, 1
        %s1938 = scalar_select %p1937, %s20, 1
        %s1939 = smul.addr %s1938, 4
        %s1940 = smul.addr %s1939, 8
        %s1941 = scalar_lea.vmem %s8, %s1940
      $region64: #{double_conv_forward.1} parent=59 // pred_fallthru
        _
    $region60: #{double_conv_forward.1} parent=5 // pred_fallthru
      _
  $region6: #{double_conv_forward.1} parent=0 // loop_footer
    %s18 = sadd.s32 1, %s14
  $region7: #{double_conv_forward.1} parent=0 // loop_footer_branch
    %13 = sbr.rel target = $region3
  $region8: #{double_conv_forward.1} parent=0 // loop_exit
    _

</llo_original>
